<compile_context>
chip_gen: v5e
topology: v5e:2x2
jax: 0.10.0
libtpu: 0.0.40
codegen_flags: <defaults>
</compile_context>

<pallas_src>
import functools

import jax
import jax.numpy as jnp
from jax.experimental import pallas as pl
from jax.experimental.pallas import tpu as pltpu


def _erf(x):
    # Abramowitz & Stegun 7.1.26 rational approximation (|err| < 1.5e-7).
    # Only exp / mul / recip, so it lowers cleanly on the TPU VPU/EUP.
    a1, a2, a3, a4, a5 = 0.254829592, -0.284496736, 1.421413741, -1.453152027, 1.061405429
    p = 0.3275911
    ax = jnp.abs(x)
    t = pl.reciprocal(1.0 + p * ax, approx=True)        # EUP approximate reciprocal
    poly = ((((a5 * t + a4) * t + a3) * t + a2) * t + a1) * t
    y = 1.0 - poly * jnp.exp(-ax * ax)
    return jnp.where(x < 0, -y, y)


def _gelu_exact(x):
    # matches torch.nn.GELU() (approximate='none')
    return 0.5 * x * (1.0 + _erf(x * 0.7071067811865476))


def _matmul_glu_store(ybuf_ref, w_ref, b_ref, o_ref, TB, H, TL, slab_out):
    """Shared epilogue: one lane-dense bf16 MXU matmul + bias + GLU + store."""
    y = ybuf_ref[...]                                                  # (C*H, TB*TL) bf16
    z = jnp.dot(w_ref[...], y, preferred_element_type=jnp.float32) + b_ref[...]  # (2H, TB*TL)
    glu = z[:H] * jax.nn.sigmoid(z[H:])                                # GLU over channels
    if slab_out:
        o_ref[0] = glu.astype(o_ref.dtype)                             # one unmasked lane-dense vst
    else:
        for tb in range(TB):
            o_ref[tb] = glu[:, tb * TL:(tb + 1) * TL].astype(o_ref.dtype)


def _make_fused_kernel(TB, C, H, L, Lk, slab_out):
    """Small-Lk path: conv taps (D folded) + GELU + output-linear + GLU, all in-kernel."""
    CH = C * H
    Lpad = Lk - 1

    def kernel(up_ref, k_ref, w_ref, b_ref, o_ref, ybuf_ref):
        # up_ref: (TB, H, Lpad + L) left-zero-padded u rows (padded in XLA, no scratch copy).
        # Tap columns (D folded into tap 0) hoisted out of the per-row loop.
        taps = [k_ref[m] for m in range(Lk)]                           # each (C, H, 1)
        for tb in range(TB):
            u_row = up_ref[tb]                                         # (H, Lpad + L)
            acc = taps[0] * u_row[None, :, Lpad:Lpad + L]              # tap 0 includes D skip
            for m in range(1, Lk):                                     # causal conv, static slices
                acc = acc + taps[m] * u_row[None, :, Lpad - m:Lpad - m + L]
            ybuf_ref[:, tb * L:(tb + 1) * L] = (
                _gelu_exact(acc.reshape(CH, L)).astype(jnp.bfloat16))
        _matmul_glu_store(ybuf_ref, w_ref, b_ref, o_ref, TB, H, L, slab_out)

    return kernel


def _make_post_kernel(TB, C, H, TL):
    """Large-Lk path: conv (with D folded) precomputed in XLA; fuse GELU + linear + GLU."""
    CH = C * H

    def kernel(yc_ref, w_ref, b_ref, o_ref, ybuf_ref):
        for tb in range(TB):
            acc = yc_ref[tb].astype(jnp.float32)                       # (C, H, TL) bf16 -> f32
            ybuf_ref[:, tb * TL:(tb + 1) * TL] = (
                _gelu_exact(acc.reshape(CH, TL)).astype(jnp.bfloat16))
        _matmul_glu_store(ybuf_ref, w_ref, b_ref, o_ref, TB, H, TL, slab_out=False)

    return kernel


def _fft_causal_conv(u, k):
    """XLA-side O(L log L) causal conv (same as the PyTorch rfft/irfft path)."""
    B, H, L = u.shape
    C, _, Lk = k.shape
    n = Lk + L
    u_f = jnp.fft.rfft(u, n=n)
    k_f = jnp.fft.rfft(k, n=n)
    y_f = jnp.einsum('bhl,chl->bchl', u_f, k_f)
    return jnp.fft.irfft(y_f, n=n)[..., :L].astype(jnp.float32)        # (B, C, H, L)


def _vmem_limit_bytes():
    """Generation-aware scoped-VMEM budget (~100 MiB v5e/v6e, ~54 MiB v7x)."""
    try:
        cap = int(pltpu.get_tpu_info().vmem_capacity_bytes)
    except Exception:  # conservative (v7x-sized) fallback
        cap = 64 * 1024 * 1024
    return min(int(cap * 0.85), 100 * 1024 * 1024)


def _inv_spec(block_shape, index_map):
    """BlockSpec for a grid-invariant operand: single-buffer it (halves its VMEM)."""
    try:
        return pl.BlockSpec(block_shape, index_map, pipeline_mode=pl.Buffered(1))
    except Exception:  # pipeline_mode / Buffered not available in this JAX version
        return pl.BlockSpec(block_shape, index_map)


def long_conv_forward(u, k, D, W, bias, *, fused_lk_max=64):
    """u: (B,H,L) f32; k: (C,H,Lk); D: (C,H); W: (2H,C*H); bias: (2H,). Returns (B,H,L)."""
    B, H, L = u.shape
    C, _, Lk = k.shape
    fused = Lk <= fused_lk_max

    w_bf16 = W.astype(jnp.bfloat16)                                    # (2H, C*H) for the MXU
    b_col = bias.reshape(2 * H, 1).astype(jnp.float32)                 # (2H, 1)
    vmem_bytes = _vmem_limit_bytes()

    if fused:
        # ---- small-Lk path: taps + skip + GELU + output-linear + GLU fully fused ----
        Lpad = Lk - 1
        # Fold batch rows into one grid step so the MXU N-dim (TB*L) is lane-dense,
        # but keep >= 2 grid steps so both TensorCores / megacore halves get work.
        TB = min(B, max(1, -(-128 // L)))
        if B >= 2 and -(-B // TB) < 2:
            TB = max(1, B // 2)
        Bp = -(-B // TB) * TB
        # Pre-pad u in XLA (batch remainder + causal left zero-pad); the kernel then
        # reads static slices directly — no VMEM pad scratch / per-row copy pass.
        up = jnp.pad(u, ((0, Bp - B), (0, 0), (Lpad, 0)))
        # Fold the D skip into tap 0: conv(u, k) + D*u == conv(u, k + D*delta).
        k_taps = jnp.transpose(k, (2, 0, 1)).astype(jnp.float32)[..., None]   # (Lk, C, H, 1)
        k_taps = k_taps.at[0].add(D.astype(jnp.float32)[..., None])

        slab_out = (L % 128) != 0   # lane-dense slab when per-row stores would be masked
        if slab_out:
            out_shape = jax.ShapeDtypeStruct((Bp // TB, H, TB * L), u.dtype)
            out_spec = pl.BlockSpec((1, H, TB * L), lambda b: (b, 0, 0))
        else:
            out_shape = jax.ShapeDtypeStruct((Bp, H, L), u.dtype)
            out_spec = pl.BlockSpec((TB, H, L), lambda b: (b, 0, 0))

        out = pl.pallas_call(
            _make_fused_kernel(TB, C, H, L, Lk, slab_out),
            out_shape=out_shape,
            grid=(Bp // TB,),
            in_specs=[
                pl.BlockSpec((TB, H, Lpad + L), lambda b: (b, 0, 0)),   # padded u
                _inv_spec((Lk, C, H, 1), lambda b: (0, 0, 0, 0)),       # conv taps (D folded)
                _inv_spec((2 * H, C * H), lambda b: (0, 0)),            # output_linear W (bf16)
                _inv_spec((2 * H, 1), lambda b: (0, 0)),                # output_linear bias
            ],
            out_specs=out_spec,
            scratch_shapes=[pltpu.VMEM((C * H, TB * L), jnp.bfloat16)], # bf16 GELU slab
            compiler_params=pltpu.CompilerParams(
                dimension_semantics=("parallel",),
                vmem_limit_bytes=vmem_bytes),
        )(up, k_taps, w_bf16, b_col)

        if slab_out:
            out = out.reshape(Bp // TB, H, TB, L).transpose(0, 2, 1, 3).reshape(Bp, H, L)
        return out[:B] if Bp != B else out

    # ---- large-Lk path (LongConv default Lk == L): FFT conv in XLA + fused epilogue ----
    # Fold the D skip into the conv kernel so the epilogue reads a single bf16 stream.
    k_fold = k.astype(jnp.float32).at[..., 0].add(D.astype(jnp.float32))
    yc = _fft_causal_conv(u, k_fold)                                    # (B, C, H, L) f32
    # Pad the sequence axis to a lane-dense multiple of 128 (epilogue is pointwise in l).
    Lp = -(-L // 128) * 128
    if Lp != L:
        yc = jnp.pad(yc, ((0, 0), (0, 0), (0, 0), (0, Lp - L)))
    yc = yc.astype(jnp.bfloat16)                                        # halve the HBM stream

    tl_cands = (2048, 1024, 512, 256, 128) if vmem_bytes >= 96 * 1024 * 1024 \
        else (512, 256, 128)
    TL = 128
    for cand in tl_cands:
        if Lp % cand == 0:
            TL = cand
            break
    TB = 1                                                              # TL >= 128 is lane-dense

    out = pl.pallas_call(
        _make_post_kernel(TB, C, H, TL),
        out_shape=jax.ShapeDtypeStruct((B, H, Lp), u.dtype),
        grid=(B // TB, Lp // TL),
        in_specs=[
            pl.BlockSpec((TB, C, H, TL), lambda b, l: (b, 0, 0, l)),    # bf16 FFT conv result
            _inv_spec((2 * H, C * H), lambda b, l: (0, 0)),             # W
            _inv_spec((2 * H, 1), lambda b, l: (0, 0)),                 # bias
        ],
        out_specs=pl.BlockSpec((TB, H, TL), lambda b, l: (b, 0, l)),
        scratch_shapes=[pltpu.VMEM((C * H, TB * TL), jnp.bfloat16)],
        compiler_params=pltpu.CompilerParams(
            dimension_semantics=("parallel", "parallel"),
            vmem_limit_bytes=vmem_bytes),
    )(yc, w_bf16, b_col)

    return out[..., :L] if Lp != L else out


def reference(u, k, D, W, bias):
    """Pure-JAX mirror of the PyTorch forward (FFT conv path), for validation."""
    B, H, L = u.shape
    C, _, Lk = k.shape
    n = Lk + L
    k_f = jnp.fft.rfft(k, n=n)
    u_f = jnp.fft.rfft(u, n=n)
    y_f = jnp.einsum('bhl,chl->bchl', u_f, k_f)
    y = jnp.fft.irfft(y_f, n=n)[..., :L]
    y = y + jnp.einsum('bhl,ch->bchl', u, D)
    y = y.reshape(B, C * H, L)
    y = jax.nn.gelu(y, approximate=False)                    # exact erf GELU
    z = jnp.einsum('oi,bil->bol', W, y) + bias[None, :, None]
    return z[:, :H] * jax.nn.sigmoid(z[:, H:])


if __name__ == "__main__":
    # d_model = H = 32, l_max = L = 16, channels = 1, batch = 2
    B, H, L, C = 2, 32, 16, 1
    key = jax.random.PRNGKey(0)
    k_u, k_D, k_k, k_W, k_b = jax.random.split(key, 5)

    u = jax.random.normal(k_u, (B, H, L), jnp.float32)                     # input (B,H,L)
    D = jax.random.normal(k_D, (C, H), jnp.float32)                        # self.D
    conv_k = jax.random.normal(k_k, (C, H, L), jnp.float32) * 0.2          # LongConvKernel weights
    W = jax.random.normal(k_W, (2 * H, C * H), jnp.float32) / jnp.sqrt(C * H)  # output_linear W
    bias = jax.random.normal(k_b, (2 * H,), jnp.float32) * 0.1

    ref = reference(u, conv_k, D, W, bias)

    # Path 1: small-Lk fully fused kernel (conv taps in-kernel).
    fwd_fused = jax.jit(long_conv_forward)
    out = jax.block_until_ready(fwd_fused(u, conv_k, D, W, bias))
    assert out.shape == (B, H, L), out.shape
    err = float(jnp.max(jnp.abs(out - ref)))
    assert jnp.allclose(out, ref, rtol=5e-2, atol=5e-2), f"fused path max abs err {err}"

    # Path 2: large-Lk path (LongConv default Lk == L): XLA FFT conv + fused epilogue kernel.
    fwd_fft = jax.jit(functools.partial(long_conv_forward, fused_lk_max=0))
    out_fft = jax.block_until_ready(fwd_fft(u, conv_k, D, W, bias))
    err_fft = float(jnp.max(jnp.abs(out_fft - ref)))
    assert jnp.allclose(out_fft, ref, rtol=5e-2, atol=5e-2), f"fft path max abs err {err_fft}"

    print("KERNEL_OK")
</pallas_src>

<mosaic_0001>
module attributes {stable_mosaic.version = 11 : i64} {
  func.func @kernel(%arg0: i32, %arg1: memref<1x32x31xf32, #tpu.memory_space<vmem>>, %arg2: memref<16x1x32x1xf32, #tpu.memory_space<vmem>>, %arg3: memref<64x32xbf16, #tpu.memory_space<vmem>>, %arg4: memref<64x1xf32, #tpu.memory_space<vmem>>, %arg5: memref<1x32x16xf32, #tpu.memory_space<vmem>>, %arg6: memref<32x16xbf16, #tpu.memory_space<vmem>>) attributes {dimension_semantics = [#tpu.dimension_semantics<parallel>], iteration_bounds = array<i64: 2>, scalar_prefetch = 0 : i64, scratch_operands = 1 : i64, tpu.core_type = #tpu.core_type<tc>, window_params = [{transform_indices = @transform_0, window_bounds = array<i64: 1, 32, 31>}, {pipeline_mode = #tpu.pipeline_mode<synchronous>, transform_indices = @transform_1, window_bounds = array<i64: 16, 1, 32, 1>}, {pipeline_mode = #tpu.pipeline_mode<synchronous>, transform_indices = @transform_2, window_bounds = array<i64: 64, 32>}, {pipeline_mode = #tpu.pipeline_mode<synchronous>, transform_indices = @transform_3, window_bounds = array<i64: 64, 1>}, {transform_indices = @transform_4, window_bounds = array<i64: 1, 32, 16>}]} {
    %c0 = arith.constant 0 : index
    %c0_0 = arith.constant 0 : index
    %c0_1 = arith.constant 0 : index
    %c0_2 = arith.constant 0 : index
    %0 = vector.load %arg2[%c0, %c0_0, %c0_1, %c0_2] : memref<16x1x32x1xf32, #tpu.memory_space<vmem>>, vector<1x1x32x1xf32>
    %1 = vector.shape_cast %0 : vector<1x1x32x1xf32> to vector<1x32x1xf32>
    %c1 = arith.constant 1 : index
    %c0_3 = arith.constant 0 : index
    %c0_4 = arith.constant 0 : index
    %c0_5 = arith.constant 0 : index
    %2 = vector.load %arg2[%c1, %c0_3, %c0_4, %c0_5] : memref<16x1x32x1xf32, #tpu.memory_space<vmem>>, vector<1x1x32x1xf32>
    %3 = vector.shape_cast %2 : vector<1x1x32x1xf32> to vector<1x32x1xf32>
    %c2 = arith.constant 2 : index
    %c0_6 = arith.constant 0 : index
    %c0_7 = arith.constant 0 : index
    %c0_8 = arith.constant 0 : index
    %4 = vector.load %arg2[%c2, %c0_6, %c0_7, %c0_8] : memref<16x1x32x1xf32, #tpu.memory_space<vmem>>, vector<1x1x32x1xf32>
    %5 = vector.shape_cast %4 : vector<1x1x32x1xf32> to vector<1x32x1xf32>
    %c3 = arith.constant 3 : index
    %c0_9 = arith.constant 0 : index
    %c0_10 = arith.constant 0 : index
    %c0_11 = arith.constant 0 : index
    %6 = vector.load %arg2[%c3, %c0_9, %c0_10, %c0_11] : memref<16x1x32x1xf32, #tpu.memory_space<vmem>>, vector<1x1x32x1xf32>
    %7 = vector.shape_cast %6 : vector<1x1x32x1xf32> to vector<1x32x1xf32>
    %c4 = arith.constant 4 : index
    %c0_12 = arith.constant 0 : index
    %c0_13 = arith.constant 0 : index
    %c0_14 = arith.constant 0 : index
    %8 = vector.load %arg2[%c4, %c0_12, %c0_13, %c0_14] : memref<16x1x32x1xf32, #tpu.memory_space<vmem>>, vector<1x1x32x1xf32>
    %9 = vector.shape_cast %8 : vector<1x1x32x1xf32> to vector<1x32x1xf32>
    %c5 = arith.constant 5 : index
    %c0_15 = arith.constant 0 : index
    %c0_16 = arith.constant 0 : index
    %c0_17 = arith.constant 0 : index
    %10 = vector.load %arg2[%c5, %c0_15, %c0_16, %c0_17] : memref<16x1x32x1xf32, #tpu.memory_space<vmem>>, vector<1x1x32x1xf32>
    %11 = vector.shape_cast %10 : vector<1x1x32x1xf32> to vector<1x32x1xf32>
    %c6 = arith.constant 6 : index
    %c0_18 = arith.constant 0 : index
    %c0_19 = arith.constant 0 : index
    %c0_20 = arith.constant 0 : index
    %12 = vector.load %arg2[%c6, %c0_18, %c0_19, %c0_20] : memref<16x1x32x1xf32, #tpu.memory_space<vmem>>, vector<1x1x32x1xf32>
    %13 = vector.shape_cast %12 : vector<1x1x32x1xf32> to vector<1x32x1xf32>
    %c7 = arith.constant 7 : index
    %c0_21 = arith.constant 0 : index
    %c0_22 = arith.constant 0 : index
    %c0_23 = arith.constant 0 : index
    %14 = vector.load %arg2[%c7, %c0_21, %c0_22, %c0_23] : memref<16x1x32x1xf32, #tpu.memory_space<vmem>>, vector<1x1x32x1xf32>
    %15 = vector.shape_cast %14 : vector<1x1x32x1xf32> to vector<1x32x1xf32>
    %c8 = arith.constant 8 : index
    %c0_24 = arith.constant 0 : index
    %c0_25 = arith.constant 0 : index
    %c0_26 = arith.constant 0 : index
    %16 = vector.load %arg2[%c8, %c0_24, %c0_25, %c0_26] : memref<16x1x32x1xf32, #tpu.memory_space<vmem>>, vector<1x1x32x1xf32>
    %17 = vector.shape_cast %16 : vector<1x1x32x1xf32> to vector<1x32x1xf32>
    %c9 = arith.constant 9 : index
    %c0_27 = arith.constant 0 : index
    %c0_28 = arith.constant 0 : index
    %c0_29 = arith.constant 0 : index
    %18 = vector.load %arg2[%c9, %c0_27, %c0_28, %c0_29] : memref<16x1x32x1xf32, #tpu.memory_space<vmem>>, vector<1x1x32x1xf32>
    %19 = vector.shape_cast %18 : vector<1x1x32x1xf32> to vector<1x32x1xf32>
    %c10 = arith.constant 10 : index
    %c0_30 = arith.constant 0 : index
    %c0_31 = arith.constant 0 : index
    %c0_32 = arith.constant 0 : index
    %20 = vector.load %arg2[%c10, %c0_30, %c0_31, %c0_32] : memref<16x1x32x1xf32, #tpu.memory_space<vmem>>, vector<1x1x32x1xf32>
    %21 = vector.shape_cast %20 : vector<1x1x32x1xf32> to vector<1x32x1xf32>
    %c11 = arith.constant 11 : index
    %c0_33 = arith.constant 0 : index
    %c0_34 = arith.constant 0 : index
    %c0_35 = arith.constant 0 : index
    %22 = vector.load %arg2[%c11, %c0_33, %c0_34, %c0_35] : memref<16x1x32x1xf32, #tpu.memory_space<vmem>>, vector<1x1x32x1xf32>
    %23 = vector.shape_cast %22 : vector<1x1x32x1xf32> to vector<1x32x1xf32>
    %c12 = arith.constant 12 : index
    %c0_36 = arith.constant 0 : index
    %c0_37 = arith.constant 0 : index
    %c0_38 = arith.constant 0 : index
    %24 = vector.load %arg2[%c12, %c0_36, %c0_37, %c0_38] : memref<16x1x32x1xf32, #tpu.memory_space<vmem>>, vector<1x1x32x1xf32>
    %25 = vector.shape_cast %24 : vector<1x1x32x1xf32> to vector<1x32x1xf32>
    %c13 = arith.constant 13 : index
    %c0_39 = arith.constant 0 : index
    %c0_40 = arith.constant 0 : index
    %c0_41 = arith.constant 0 : index
    %26 = vector.load %arg2[%c13, %c0_39, %c0_40, %c0_41] : memref<16x1x32x1xf32, #tpu.memory_space<vmem>>, vector<1x1x32x1xf32>
    %27 = vector.shape_cast %26 : vector<1x1x32x1xf32> to vector<1x32x1xf32>
    %c14 = arith.constant 14 : index
    %c0_42 = arith.constant 0 : index
    %c0_43 = arith.constant 0 : index
    %c0_44 = arith.constant 0 : index
    %28 = vector.load %arg2[%c14, %c0_42, %c0_43, %c0_44] : memref<16x1x32x1xf32, #tpu.memory_space<vmem>>, vector<1x1x32x1xf32>
    %29 = vector.shape_cast %28 : vector<1x1x32x1xf32> to vector<1x32x1xf32>
    %c15 = arith.constant 15 : index
    %c0_45 = arith.constant 0 : index
    %c0_46 = arith.constant 0 : index
    %c0_47 = arith.constant 0 : index
    %30 = vector.load %arg2[%c15, %c0_45, %c0_46, %c0_47] : memref<16x1x32x1xf32, #tpu.memory_space<vmem>>, vector<1x1x32x1xf32>
    %31 = vector.shape_cast %30 : vector<1x1x32x1xf32> to vector<1x32x1xf32>
    %c0_48 = arith.constant 0 : index
    %c0_49 = arith.constant 0 : index
    %c0_50 = arith.constant 0 : index
    %32 = vector.load %arg1[%c0_48, %c0_49, %c0_50] : memref<1x32x31xf32, #tpu.memory_space<vmem>>, vector<1x32x31xf32>
    %33 = vector.shape_cast %32 : vector<1x32x31xf32> to vector<32x31xf32>
    %34 = vector.extract_strided_slice %33 {offsets = [0, 15], sizes = [32, 16], strides = [1, 1]} : vector<32x31xf32> to vector<32x16xf32>
    %35 = vector.shape_cast %34 : vector<32x16xf32> to vector<1x32x16xf32>
    %36 = vector.broadcast %1 : vector<1x32x1xf32> to vector<1x32x16xf32>
    %37 = arith.mulf %36, %35 : vector<1x32x16xf32>
    %38 = vector.extract_strided_slice %33 {offsets = [0, 14], sizes = [32, 16], strides = [1, 1]} : vector<32x31xf32> to vector<32x16xf32>
    %39 = vector.shape_cast %38 : vector<32x16xf32> to vector<1x32x16xf32>
    %40 = vector.broadcast %3 : vector<1x32x1xf32> to vector<1x32x16xf32>
    %41 = arith.mulf %40, %39 : vector<1x32x16xf32>
    %42 = arith.addf %37, %41 : vector<1x32x16xf32>
    %43 = vector.extract_strided_slice %33 {offsets = [0, 13], sizes = [32, 16], strides = [1, 1]} : vector<32x31xf32> to vector<32x16xf32>
    %44 = vector.shape_cast %43 : vector<32x16xf32> to vector<1x32x16xf32>
    %45 = vector.broadcast %5 : vector<1x32x1xf32> to vector<1x32x16xf32>
    %46 = arith.mulf %45, %44 : vector<1x32x16xf32>
    %47 = arith.addf %42, %46 : vector<1x32x16xf32>
    %48 = vector.extract_strided_slice %33 {offsets = [0, 12], sizes = [32, 16], strides = [1, 1]} : vector<32x31xf32> to vector<32x16xf32>
    %49 = vector.shape_cast %48 : vector<32x16xf32> to vector<1x32x16xf32>
    %50 = vector.broadcast %7 : vector<1x32x1xf32> to vector<1x32x16xf32>
    %51 = arith.mulf %50, %49 : vector<1x32x16xf32>
    %52 = arith.addf %47, %51 : vector<1x32x16xf32>
    %53 = vector.extract_strided_slice %33 {offsets = [0, 11], sizes = [32, 16], strides = [1, 1]} : vector<32x31xf32> to vector<32x16xf32>
    %54 = vector.shape_cast %53 : vector<32x16xf32> to vector<1x32x16xf32>
    %55 = vector.broadcast %9 : vector<1x32x1xf32> to vector<1x32x16xf32>
    %56 = arith.mulf %55, %54 : vector<1x32x16xf32>
    %57 = arith.addf %52, %56 : vector<1x32x16xf32>
    %58 = vector.extract_strided_slice %33 {offsets = [0, 10], sizes = [32, 16], strides = [1, 1]} : vector<32x31xf32> to vector<32x16xf32>
    %59 = vector.shape_cast %58 : vector<32x16xf32> to vector<1x32x16xf32>
    %60 = vector.broadcast %11 : vector<1x32x1xf32> to vector<1x32x16xf32>
    %61 = arith.mulf %60, %59 : vector<1x32x16xf32>
    %62 = arith.addf %57, %61 : vector<1x32x16xf32>
    %63 = vector.extract_strided_slice %33 {offsets = [0, 9], sizes = [32, 16], strides = [1, 1]} : vector<32x31xf32> to vector<32x16xf32>
    %64 = vector.shape_cast %63 : vector<32x16xf32> to vector<1x32x16xf32>
    %65 = vector.broadcast %13 : vector<1x32x1xf32> to vector<1x32x16xf32>
    %66 = arith.mulf %65, %64 : vector<1x32x16xf32>
    %67 = arith.addf %62, %66 : vector<1x32x16xf32>
    %68 = vector.extract_strided_slice %33 {offsets = [0, 8], sizes = [32, 16], strides = [1, 1]} : vector<32x31xf32> to vector<32x16xf32>
    %69 = vector.shape_cast %68 : vector<32x16xf32> to vector<1x32x16xf32>
    %70 = vector.broadcast %15 : vector<1x32x1xf32> to vector<1x32x16xf32>
    %71 = arith.mulf %70, %69 : vector<1x32x16xf32>
    %72 = arith.addf %67, %71 : vector<1x32x16xf32>
    %73 = vector.extract_strided_slice %33 {offsets = [0, 7], sizes = [32, 16], strides = [1, 1]} : vector<32x31xf32> to vector<32x16xf32>
    %74 = vector.shape_cast %73 : vector<32x16xf32> to vector<1x32x16xf32>
    %75 = vector.broadcast %17 : vector<1x32x1xf32> to vector<1x32x16xf32>
    %76 = arith.mulf %75, %74 : vector<1x32x16xf32>
    %77 = arith.addf %72, %76 : vector<1x32x16xf32>
    %78 = vector.extract_strided_slice %33 {offsets = [0, 6], sizes = [32, 16], strides = [1, 1]} : vector<32x31xf32> to vector<32x16xf32>
    %79 = vector.shape_cast %78 : vector<32x16xf32> to vector<1x32x16xf32>
    %80 = vector.broadcast %19 : vector<1x32x1xf32> to vector<1x32x16xf32>
    %81 = arith.mulf %80, %79 : vector<1x32x16xf32>
    %82 = arith.addf %77, %81 : vector<1x32x16xf32>
    %83 = vector.extract_strided_slice %33 {offsets = [0, 5], sizes = [32, 16], strides = [1, 1]} : vector<32x31xf32> to vector<32x16xf32>
    %84 = vector.shape_cast %83 : vector<32x16xf32> to vector<1x32x16xf32>
    %85 = vector.broadcast %21 : vector<1x32x1xf32> to vector<1x32x16xf32>
    %86 = arith.mulf %85, %84 : vector<1x32x16xf32>
    %87 = arith.addf %82, %86 : vector<1x32x16xf32>
    %88 = vector.extract_strided_slice %33 {offsets = [0, 4], sizes = [32, 16], strides = [1, 1]} : vector<32x31xf32> to vector<32x16xf32>
    %89 = vector.shape_cast %88 : vector<32x16xf32> to vector<1x32x16xf32>
    %90 = vector.broadcast %23 : vector<1x32x1xf32> to vector<1x32x16xf32>
    %91 = arith.mulf %90, %89 : vector<1x32x16xf32>
    %92 = arith.addf %87, %91 : vector<1x32x16xf32>
    %93 = vector.extract_strided_slice %33 {offsets = [0, 3], sizes = [32, 16], strides = [1, 1]} : vector<32x31xf32> to vector<32x16xf32>
    %94 = vector.shape_cast %93 : vector<32x16xf32> to vector<1x32x16xf32>
    %95 = vector.broadcast %25 : vector<1x32x1xf32> to vector<1x32x16xf32>
    %96 = arith.mulf %95, %94 : vector<1x32x16xf32>
    %97 = arith.addf %92, %96 : vector<1x32x16xf32>
    %98 = vector.extract_strided_slice %33 {offsets = [0, 2], sizes = [32, 16], strides = [1, 1]} : vector<32x31xf32> to vector<32x16xf32>
    %99 = vector.shape_cast %98 : vector<32x16xf32> to vector<1x32x16xf32>
    %100 = vector.broadcast %27 : vector<1x32x1xf32> to vector<1x32x16xf32>
    %101 = arith.mulf %100, %99 : vector<1x32x16xf32>
    %102 = arith.addf %97, %101 : vector<1x32x16xf32>
    %103 = vector.extract_strided_slice %33 {offsets = [0, 1], sizes = [32, 16], strides = [1, 1]} : vector<32x31xf32> to vector<32x16xf32>
    %104 = vector.shape_cast %103 : vector<32x16xf32> to vector<1x32x16xf32>
    %105 = vector.broadcast %29 : vector<1x32x1xf32> to vector<1x32x16xf32>
    %106 = arith.mulf %105, %104 : vector<1x32x16xf32>
    %107 = arith.addf %102, %106 : vector<1x32x16xf32>
    %108 = vector.extract_strided_slice %33 {offsets = [0, 0], sizes = [32, 16], strides = [1, 1]} : vector<32x31xf32> to vector<32x16xf32>
    %109 = vector.shape_cast %108 : vector<32x16xf32> to vector<1x32x16xf32>
    %110 = vector.broadcast %31 : vector<1x32x1xf32> to vector<1x32x16xf32>
    %111 = arith.mulf %110, %109 : vector<1x32x16xf32>
    %112 = arith.addf %107, %111 : vector<1x32x16xf32>
    %113 = vector.shape_cast %112 : vector<1x32x16xf32> to vector<32x16xf32>
    %cst = arith.constant 5.000000e-01 : f32
    %114 = vector.broadcast %cst : f32 to vector<32x16xf32>
    %115 = arith.mulf %114, %113 : vector<32x16xf32>
    %cst_51 = arith.constant 0.707106769 : f32
    %116 = vector.broadcast %cst_51 : f32 to vector<32x16xf32>
    %117 = arith.mulf %113, %116 : vector<32x16xf32>
    %118 = math.absf %117 : vector<32x16xf32>
    %cst_52 = arith.constant 0.327591091 : f32
    %119 = vector.broadcast %cst_52 : f32 to vector<32x16xf32>
    %120 = arith.mulf %119, %118 : vector<32x16xf32>
    %cst_53 = arith.constant 1.000000e+00 : f32
    %121 = vector.broadcast %cst_53 : f32 to vector<32x16xf32>
    %122 = arith.addf %121, %120 : vector<32x16xf32>
    %123 = tpu.reciprocal %122 {approx = true} : vector<32x16xf32> -> vector<32x16xf32>
    %cst_54 = arith.constant 1.06140542 : f32
    %124 = vector.broadcast %cst_54 : f32 to vector<32x16xf32>
    %125 = arith.mulf %124, %123 : vector<32x16xf32>
    %cst_55 = arith.constant -1.45315206 : f32
    %126 = vector.broadcast %cst_55 : f32 to vector<32x16xf32>
    %127 = arith.addf %125, %126 : vector<32x16xf32>
    %128 = arith.mulf %127, %123 : vector<32x16xf32>
    %cst_56 = arith.constant 1.42141378 : f32
    %129 = vector.broadcast %cst_56 : f32 to vector<32x16xf32>
    %130 = arith.addf %128, %129 : vector<32x16xf32>
    %131 = arith.mulf %130, %123 : vector<32x16xf32>
    %cst_57 = arith.constant -0.284496725 : f32
    %132 = vector.broadcast %cst_57 : f32 to vector<32x16xf32>
    %133 = arith.addf %131, %132 : vector<32x16xf32>
    %134 = arith.mulf %133, %123 : vector<32x16xf32>
    %cst_58 = arith.constant 0.254829586 : f32
    %135 = vector.broadcast %cst_58 : f32 to vector<32x16xf32>
    %136 = arith.addf %134, %135 : vector<32x16xf32>
    %137 = arith.mulf %136, %123 : vector<32x16xf32>
    %cst_59 = arith.constant 0.000000e+00 : f32
    %138 = vector.broadcast %cst_59 : f32 to vector<32x16xf32>
    %139 = arith.subf %138, %118 : vector<32x16xf32>
    %140 = arith.mulf %139, %118 : vector<32x16xf32>
    %141 = math.exp %140 : vector<32x16xf32>
    %142 = arith.mulf %137, %141 : vector<32x16xf32>
    %cst_60 = arith.constant 1.000000e+00 : f32
    %143 = vector.broadcast %cst_60 : f32 to vector<32x16xf32>
    %144 = arith.subf %143, %142 : vector<32x16xf32>
    %cst_61 = arith.constant 0.000000e+00 : f32
    %145 = vector.broadcast %cst_61 : f32 to vector<32x16xf32>
    %146 = arith.cmpf olt, %117, %145 : vector<32x16xf32>
    %cst_62 = arith.constant 0.000000e+00 : f32
    %147 = vector.broadcast %cst_62 : f32 to vector<32x16xf32>
    %148 = arith.subf %147, %144 : vector<32x16xf32>
    %149 = arith.select %146, %148, %144 : vector<32x16xi1>, vector<32x16xf32>
    %cst_63 = arith.constant 1.000000e+00 : f32
    %150 = vector.broadcast %cst_63 : f32 to vector<32x16xf32>
    %151 = arith.addf %150, %149 : vector<32x16xf32>
    %152 = arith.mulf %115, %151 : vector<32x16xf32>
    %153 = arith.truncf %152 : vector<32x16xf32> to vector<32x16xbf16>
    %c0_64 = arith.constant 0 : index
    %c0_65 = arith.constant 0 : index
    %154 = vector.load %arg6[%c0_64, %c0_65] : memref<32x16xbf16, #tpu.memory_space<vmem>>, vector<32x16xbf16>
    tpu.vector_store %arg6[%c0_64, %c0_65], %153 {strides = array<i32>} : memref<32x16xbf16, #tpu.memory_space<vmem>>, vector<32x16xbf16>,
    %c0_66 = arith.constant 0 : index
    %c0_67 = arith.constant 0 : index
    %155 = vector.load %arg6[%c0_66, %c0_67] : memref<32x16xbf16, #tpu.memory_space<vmem>>, vector<32x16xbf16>
    %c0_68 = arith.constant 0 : index
    %c0_69 = arith.constant 0 : index
    %156 = vector.load %arg3[%c0_68, %c0_69] : memref<64x32xbf16, #tpu.memory_space<vmem>>, vector<64x32xbf16>
    %cst_70 = arith.constant dense<0.000000e+00> : vector<64x16xf32>
    %157 = tpu.matmul %156, %155, %cst_70 {dimension_numbers = #tpu.dot_dimension_numbers<[1], [0], [0], [1], [0, 0, 1, 1], [], []>} : vector<64x32xbf16>, vector<32x16xbf16>, vector<64x16xf32> -> vector<64x16xf32>
    %c0_71 = arith.constant 0 : index
    %c0_72 = arith.constant 0 : index
    %158 = vector.load %arg4[%c0_71, %c0_72] : memref<64x1xf32, #tpu.memory_space<vmem>>, vector<64x1xf32>
    %159 = vector.broadcast %158 : vector<64x1xf32> to vector<64x16xf32>
    %160 = arith.addf %157, %159 : vector<64x16xf32>
    %161 = vector.extract_strided_slice %160 {offsets = [0, 0], sizes = [32, 16], strides = [1, 1]} : vector<64x16xf32> to vector<32x16xf32>
    %162 = vector.extract_strided_slice %160 {offsets = [32, 0], sizes = [32, 16], strides = [1, 1]} : vector<64x16xf32> to vector<32x16xf32>
    %163 = arith.negf %162 : vector<32x16xf32>
    %164 = math.exp %163 : vector<32x16xf32>
    %cst_73 = arith.constant 1.000000e+00 : f32
    %165 = vector.broadcast %cst_73 : f32 to vector<32x16xf32>
    %166 = arith.addf %165, %164 : vector<32x16xf32>
    %167 = arith.divf %165, %166 : vector<32x16xf32>
    %168 = arith.mulf %161, %167 : vector<32x16xf32>
    %c0_74 = arith.constant 0 : index
    %c0_75 = arith.constant 0 : index
    %c0_76 = arith.constant 0 : index
    %169 = vector.load %arg5[%c0_74, %c0_75, %c0_76] : memref<1x32x16xf32, #tpu.memory_space<vmem>>, vector<1x32x16xf32>
    %170 = vector.shape_cast %169 : vector<1x32x16xf32> to vector<32x16xf32>
    %171 = vector.shape_cast %168 : vector<32x16xf32> to vector<1x32x16xf32>
    tpu.vector_store %arg5[%c0_74, %c0_75, %c0_76], %171 {strides = array<i32>} : memref<1x32x16xf32, #tpu.memory_space<vmem>>, vector<1x32x16xf32>,
    return
  }
  func.func @transform_0(%arg0: i32) -> (i32, i32, i32) {
    %c0_i32 = arith.constant 0 : i32
    %c0_i32_0 = arith.constant 0 : i32
    %c0_i32_1 = arith.constant 0 : i32
    return %arg0, %c0_i32, %c0_i32_0 : i32, i32, i32
  }
  func.func @transform_1(%arg0: i32) -> (i32, i32, i32, i32) {
    %c0_i32 = arith.constant 0 : i32
    %c0_i32_0 = arith.constant 0 : i32
    %c0_i32_1 = arith.constant 0 : i32
    %c0_i32_2 = arith.constant 0 : i32
    %c0_i32_3 = arith.constant 0 : i32
    return %c0_i32, %c0_i32_0, %c0_i32_1, %c0_i32_2 : i32, i32, i32, i32
  }
  func.func @transform_2(%arg0: i32) -> (i32, i32) {
    %c0_i32 = arith.constant 0 : i32
    %c0_i32_0 = arith.constant 0 : i32
    %c0_i32_1 = arith.constant 0 : i32
    return %c0_i32, %c0_i32_0 : i32, i32
  }
  func.func @transform_3(%arg0: i32) -> (i32, i32) {
    %c0_i32 = arith.constant 0 : i32
    %c0_i32_0 = arith.constant 0 : i32
    %c0_i32_1 = arith.constant 0 : i32
    return %c0_i32, %c0_i32_0 : i32, i32
  }
  func.func @transform_4(%arg0: i32) -> (i32, i32, i32) {
    %c0_i32 = arith.constant 0 : i32
    %c0_i32_0 = arith.constant 0 : i32
    %c0_i32_1 = arith.constant 0 : i32
    return %arg0, %c0_i32, %c0_i32_0 : i32, i32, i32
  }
}

</mosaic_0001>

<llo_original>
// kernel: long_conv_forward.1
$region0: #{long_conv_forward.1}
  #allocation0 [shape = 'u32[]', space=smem, size = 0x4, offset = 0x4, fixed_abs, tag = 'smem constant byte address 0x4 - core index']
  #allocation1 [shape = 'u32[72,128]{1,0:T(1,128)}', space=vmem, size = 0x9000, scoped, tag = 'internal scratch']
  #allocation2 [shape = 'bf16[32,16]{1,0:T(8,128)(2,1)}', space=vmem, size = 0x2000, scoped, tag = 'scratch operand']
  %s0 = inlined_call_operand.vmem [shape: f32[2,32,31], index: 0, kind: input, shape index: {}]
  %s1 = inlined_call_operand.vmem [shape: f32[16,1,32,1], index: 1, kind: input, shape index: {}]
  %s2 = inlined_call_operand.vmem [shape: bf16[64,32], index: 2, kind: input, shape index: {}]
  %s3 = inlined_call_operand.vmem [shape: f32[64,1], index: 3, kind: input, shape index: {}]
  %s4 = inlined_call_operand.vmem [shape: f32[2,32,16], index: 4, kind: output, shape index: {}]
  %s5 = sld [smem:[#allocation0]]
  $region49: #{long_conv_forward.1} parent=0
    _
  %s7 = ssub.s32 1, %s5
  %s8 = scalar_select 0, %s7, %s5
  loop: start=0, step=1, limit=4
  $region2: #{long_conv_forward.1} parent=0 // loop_pre_header
    _
  $region3: #{long_conv_forward.1} parent=0 // loop_header
    %s10 = sphi 0, %s14
    %p11 = scmp.ge.s32.totalorder %s10, 4
    %s20 = sphi 0, %s22
    %s23 = sphi 0, %s20
    %s24 = sphi 0, %s23
    %s40 = sphi 0, %s24
    %s44 = sphi 0, %s44
    %s46 = sphi 0, %s44
    %s47 = sphi 0, %s46
    %s61 = sphi 0, %s47
    %s65 = sphi 0, %s65
    %s67 = sphi 0, %s65
    %s68 = sphi 0, %s67
    %s82 = sphi 0, %s68
    %s86 = sphi 0, %s86
    %s88 = sphi 0, %s86
    %s89 = sphi 0, %s88
    %s103 = sphi 0, %s89
    %s109 = sphi 0, %s111
    %s112 = sphi 0, %s109
    %s113 = sphi 0, %s112
    %s129 = sphi 0, %s113
  $region4: #{long_conv_forward.1} parent=0 // loop_header_branch
    %13 = sbr.rel (%p11) target = $region8
  $region5: #{long_conv_forward.1} parent=0 // loop_body
    %s15 = ssub.s32 %s10, 1
    %s16 = ssub.s32 %s10, 2
    %s17 = sadd.s32 %s10, 1
    %s18 = ssub.s32 %s10, %s17
    %p19 = scmp.eq.s32.totalorder %s18, 0
    %s21 = sadd.s32 %s20, 1
    %s22 = scalar_select %p19, %s20, %s21
    %p25 = pneg %p19
    %p26 = scmp.eq.s32.totalorder %s10, 1
    %p27 = por %p25, %p26
    %p28 = scmp.ne.s32.totalorder %s20, %s23
    %p29 = scmp.eq.s32.totalorder %s10, 0
    %p30 = por %p28, %p29
    %p31 = scmp.ne.s32.totalorder %s20, %s23
    %p32 = scmp.eq.s32.totalorder %s15, 1
    %p33 = por %p31, %p32
    %p34 = scmp.ne.s32.totalorder %s23, %s24
    %p35 = scmp.eq.s32.totalorder %s15, 0
    %p36 = por %p34, %p35
    %p37 = scmp.ne.s32.totalorder %s23, %s24
    %p38 = scmp.eq.s32.totalorder %s16, 1
    %p39 = por %p37, %p38
    %p41 = scmp.ne.s32.totalorder %s24, %s40
    %p42 = scmp.eq.s32.totalorder %s16, 0
    %p43 = por %p41, %p42
    %s45 = sadd.s32 %s44, 1
    %p48 = scmp.eq.s32.totalorder %s10, 1
    %p49 = scmp.ne.s32.totalorder %s44, %s46
    %p50 = scmp.eq.s32.totalorder %s10, 0
    %p51 = por %p49, %p50
    %p52 = scmp.ne.s32.totalorder %s44, %s46
    %p53 = scmp.eq.s32.totalorder %s15, 1
    %p54 = por %p52, %p53
    %p55 = scmp.ne.s32.totalorder %s46, %s47
    %p56 = scmp.eq.s32.totalorder %s15, 0
    %p57 = por %p55, %p56
    %p58 = scmp.ne.s32.totalorder %s46, %s47
    %p59 = scmp.eq.s32.totalorder %s16, 1
    %p60 = por %p58, %p59
    %p62 = scmp.ne.s32.totalorder %s47, %s61
    %p63 = scmp.eq.s32.totalorder %s16, 0
    %p64 = por %p62, %p63
    %s66 = sadd.s32 %s65, 1
    %p69 = scmp.eq.s32.totalorder %s10, 1
    %p70 = scmp.ne.s32.totalorder %s65, %s67
    %p71 = scmp.eq.s32.totalorder %s10, 0
    %p72 = por %p70, %p71
    %p73 = scmp.ne.s32.totalorder %s65, %s67
    %p74 = scmp.eq.s32.totalorder %s15, 1
    %p75 = por %p73, %p74
    %p76 = scmp.ne.s32.totalorder %s67, %s68
    %p77 = scmp.eq.s32.totalorder %s15, 0
    %p78 = por %p76, %p77
    %p79 = scmp.ne.s32.totalorder %s67, %s68
    %p80 = scmp.eq.s32.totalorder %s16, 1
    %p81 = por %p79, %p80
    %p83 = scmp.ne.s32.totalorder %s68, %s82
    %p84 = scmp.eq.s32.totalorder %s16, 0
    %p85 = por %p83, %p84
    %s87 = sadd.s32 %s86, 1
    %p90 = scmp.eq.s32.totalorder %s10, 1
    %p91 = scmp.ne.s32.totalorder %s86, %s88
    %p92 = scmp.eq.s32.totalorder %s10, 0
    %p93 = por %p91, %p92
    %p94 = scmp.ne.s32.totalorder %s86, %s88
    %p95 = scmp.eq.s32.totalorder %s15, 1
    %p96 = por %p94, %p95
    %p97 = scmp.ne.s32.totalorder %s88, %s89
    %p98 = scmp.eq.s32.totalorder %s15, 0
    %p99 = por %p97, %p98
    %p100 = scmp.ne.s32.totalorder %s88, %s89
    %p101 = scmp.eq.s32.totalorder %s16, 1
    %p102 = por %p100, %p101
    %p104 = scmp.ne.s32.totalorder %s89, %s103
    %p105 = scmp.eq.s32.totalorder %s16, 0
    %p106 = por %p104, %p105
    %s107 = ssub.s32 %s10, %s17
    %p108 = scmp.eq.s32.totalorder %s107, 0
    %s110 = sadd.s32 %s109, 1
    %s111 = scalar_select %p108, %s109, %s110
    %p114 = pneg %p108
    %p115 = scmp.eq.s32.totalorder %s10, 1
    %p116 = por %p114, %p115
    %p117 = scmp.ne.s32.totalorder %s109, %s112
    %p118 = scmp.eq.s32.totalorder %s10, 0
    %p119 = por %p117, %p118
    %p120 = scmp.ne.s32.totalorder %s109, %s112
    %p121 = scmp.eq.s32.totalorder %s15, 1
    %p122 = por %p120, %p121
    %p123 = scmp.ne.s32.totalorder %s112, %s113
    %p124 = scmp.eq.s32.totalorder %s15, 0
    %p125 = por %p123, %p124
    %p126 = scmp.ne.s32.totalorder %s112, %s113
    %p127 = scmp.eq.s32.totalorder %s16, 1
    %p128 = por %p126, %p127
    %p130 = scmp.ne.s32.totalorder %s113, %s129
    %p131 = scmp.eq.s32.totalorder %s16, 0
    %p132 = por %p130, %p131
    %p133 = scmp.le.s32.totalorder 1, %s10
    %p134 = scmp.lt.s32.totalorder %s10, 3
    %p135 = pnand %p133, %p134
    %p136 = pneg %p135
    // Predicated region
    $region9: #{long_conv_forward.1} parent=5 // pred_check
      _
    $region10: #{long_conv_forward.1} parent=5 // pred_check_branch
      %138 = sbr.rel (%p135) target = $region12
    $region11: #{long_conv_forward.1} parent=5 // pred_region
      %s139 = ssub.s32 %s10, 1
      // Predicated region
      $region13: #{long_conv_forward.1} parent=11 // pred_check
        %p140 = pneg %p57
      $region14: #{long_conv_forward.1} parent=11 // pred_check_branch
        %142 = sbr.rel (%p140) target = $region16
      $region15: #{long_conv_forward.1} parent=11 // pred_region
        _
      $region16: #{long_conv_forward.1} parent=11 // pred_fallthru
        _
      // Predicated region
      $region17: #{long_conv_forward.1} parent=11 // pred_check
        %p143 = pneg %p78
      $region18: #{long_conv_forward.1} parent=11 // pred_check_branch
        %145 = sbr.rel (%p143) target = $region20
      $region19: #{long_conv_forward.1} parent=11 // pred_region
        _
      $region20: #{long_conv_forward.1} parent=11 // pred_fallthru
        _
      // Predicated region
      $region21: #{long_conv_forward.1} parent=11 // pred_check
        %p146 = pneg %p99
      $region22: #{long_conv_forward.1} parent=11 // pred_check_branch
        %148 = sbr.rel (%p146) target = $region24
      $region23: #{long_conv_forward.1} parent=11 // pred_region
        _
      $region24: #{long_conv_forward.1} parent=11 // pred_fallthru
        _
    $region12: #{long_conv_forward.1} parent=5 // pred_fallthru
      _
    %p149 = scmp.lt.s32.totalorder %s10, 2
    // Predicated region
    $region25: #{long_conv_forward.1} parent=5 // pred_check
      %p150 = pneg %p149
    $region26: #{long_conv_forward.1} parent=5 // pred_check_branch
      %152 = sbr.rel (%p150) target = $region28
    $region27: #{long_conv_forward.1} parent=5 // pred_region
      // Predicated region
      $region29: #{long_conv_forward.1} parent=27 // pred_check
        %p153 = pneg %p30
      $region30: #{long_conv_forward.1} parent=27 // pred_check_branch
        %155 = sbr.rel (%p153) target = $region32
      $region31: #{long_conv_forward.1} parent=27 // pred_region
        %p156 = scmp.lt.s32.totalorder %s10, 1
        %s157 = scalar_select %p156, %s10, 1
        %s158 = smul.addr %s157, 4
        %s159 = smul.addr %s158, 8
        %s160 = scalar_lea.vmem %s0, %s159
      $region32: #{long_conv_forward.1} parent=27 // pred_fallthru
        _
    $region28: #{long_conv_forward.1} parent=5 // pred_fallthru
      _
    %p161 = scmp.le.s32.totalorder 1, %s10
    %p162 = scmp.lt.s32.totalorder %s10, 3
    %p163 = pnand %p161, %p162
    %p164 = pneg %p163
    // Predicated region
    $region33: #{long_conv_forward.1} parent=5 // pred_check
      _
    $region34: #{long_conv_forward.1} parent=5 // pred_check_branch
      %166 = sbr.rel (%p163) target = $region36
    $region35: #{long_conv_forward.1} parent=5 // pred_region
      %s167 = ssub.s32 %s10, 1
      %p168 = scmp.lt.s32.totalorder %s15, 1
      %s169 = scalar_select %p168, %s15, 1
      %s170 = smul.addr %s169, 4
      %s171 = smul.addr %s170, 8
      %s172 = scalar_lea.vmem %s0, %s171
      %p173 = pneg %p36
      %p174 = pneg %p33
      %p175 = pneg %p57
      %p176 = pneg %p54
      %p177 = pneg %p78
      %p178 = pneg %p75
      %p179 = pneg %p99
      %p180 = pneg %p96
      %p181 = pneg %p125
      %p182 = pneg %p122
      %p183 = scmp.lt.s32.totalorder %s15, 1
      %s184 = scalar_select %p183, %s15, 1
      %s185 = smul.addr %s184, 4
      %s186 = smul.addr %s185, 8
      %s187 = scalar_lea.vmem %s4, %s186
      %p188 = scmp.lt.s32.totalorder %s15, 1
      %s189 = scalar_select %p188, %s15, 1
      %s190 = smul.addr %s189, 4
      %s191 = smul.addr %s190, 8
      %s192 = scalar_lea.vmem %s0, %s191
      %p193 = scmp.lt.s32.totalorder %s15, 1
      %s194 = scalar_select %p193, %s15, 1
      %s195 = smul.addr %s194, 4
      %s196 = smul.addr %s195, 8
      %s197 = scalar_lea.vmem %s4, %s196
      %v199 = vld [vmem:[%s1] sm:$0xff]
      %v200 = vld [vmem:[%s1 + $0x8] sm:$0xff]
      %v201 = vld [vmem:[%s1 + $0x10] sm:$0xff]
      %v202 = vld [vmem:[%s1 + $0x18] sm:$0xff]
      %s203 = scalar_lea.vmem %s1, 32
      %v204 = vld [vmem:[%s203] sm:$0xff]
      %v205 = vld [vmem:[%s203 + $0x8] sm:$0xff]
      %v206 = vld [vmem:[%s203 + $0x10] sm:$0xff]
      %v207 = vld [vmem:[%s203 + $0x18] sm:$0xff]
      %s208 = scalar_lea.vmem %s1, 64
      %v209 = vld [vmem:[%s208] sm:$0xff]
      %v210 = vld [vmem:[%s208 + $0x8] sm:$0xff]
      %v211 = vld [vmem:[%s208 + $0x10] sm:$0xff]
      %v212 = vld [vmem:[%s208 + $0x18] sm:$0xff]
      %s213 = scalar_lea.vmem %s1, 96
      %v214 = vld [vmem:[%s213] sm:$0xff]
      %v215 = vld [vmem:[%s213 + $0x8] sm:$0xff]
      %v216 = vld [vmem:[%s213 + $0x10] sm:$0xff]
      %v217 = vld [vmem:[%s213 + $0x18] sm:$0xff]
      %s218 = scalar_lea.vmem %s1, 128
      %v219 = vld [vmem:[%s218] sm:$0xff]
      %v220 = vld [vmem:[%s218 + $0x8] sm:$0xff]
      %v221 = vld [vmem:[%s218 + $0x10] sm:$0xff]
      %v222 = vld [vmem:[%s218 + $0x18] sm:$0xff]
      %s223 = scalar_lea.vmem %s1, 160
      %v224 = vld [vmem:[%s223] sm:$0xff]
      %v225 = vld [vmem:[%s223 + $0x8] sm:$0xff]
      %v226 = vld [vmem:[%s223 + $0x10] sm:$0xff]
      %v227 = vld [vmem:[%s223 + $0x18] sm:$0xff]
      %s228 = scalar_lea.vmem %s1, 192
      %v229 = vld [vmem:[%s228] sm:$0xff]
      %v230 = vld [vmem:[%s228 + $0x8] sm:$0xff]
      %v231 = vld [vmem:[%s228 + $0x10] sm:$0xff]
      %v232 = vld [vmem:[%s228 + $0x18] sm:$0xff]
      %s233 = scalar_lea.vmem %s1, 224
      %v234 = vld [vmem:[%s233] sm:$0xff]
      %v235 = vld [vmem:[%s233 + $0x8] sm:$0xff]
      %v236 = vld [vmem:[%s233 + $0x10] sm:$0xff]
      %v237 = vld [vmem:[%s233 + $0x18] sm:$0xff]
      %s238 = scalar_lea.vmem %s1, 256
      %v239 = vld [vmem:[%s238] sm:$0xff]
      %v240 = vld [vmem:[%s238 + $0x8] sm:$0xff]
      %v241 = vld [vmem:[%s238 + $0x10] sm:$0xff]
      %v242 = vld [vmem:[%s238 + $0x18] sm:$0xff]
      %s243 = scalar_lea.vmem %s1, 288
      %v244 = vld [vmem:[%s243] sm:$0xff]
      %v245 = vld [vmem:[%s243 + $0x8] sm:$0xff]
      %v246 = vld [vmem:[%s243 + $0x10] sm:$0xff]
      %v247 = vld [vmem:[%s243 + $0x18] sm:$0xff]
      %s248 = scalar_lea.vmem %s1, 320
      %v249 = vld [vmem:[%s248] sm:$0xff]
      %v250 = vld [vmem:[%s248 + $0x8] sm:$0xff]
      %v251 = vld [vmem:[%s248 + $0x10] sm:$0xff]
      %v252 = vld [vmem:[%s248 + $0x18] sm:$0xff]
      %s253 = scalar_lea.vmem %s1, 352
      %v254 = vld [vmem:[%s253] sm:$0xff]
      %v255 = vld [vmem:[%s253 + $0x8] sm:$0xff]
      %v256 = vld [vmem:[%s253 + $0x10] sm:$0xff]
      %v257 = vld [vmem:[%s253 + $0x18] sm:$0xff]
      %s258 = scalar_lea.vmem %s1, 384
      %v259 = vld [vmem:[%s258] sm:$0xff]
      %v260 = vld [vmem:[%s258 + $0x8] sm:$0xff]
      %v261 = vld [vmem:[%s258 + $0x10] sm:$0xff]
      %v262 = vld [vmem:[%s258 + $0x18] sm:$0xff]
      %s263 = scalar_lea.vmem %s1, 416
      %v264 = vld [vmem:[%s263] sm:$0xff]
      %v265 = vld [vmem:[%s263 + $0x8] sm:$0xff]
      %v266 = vld [vmem:[%s263 + $0x10] sm:$0xff]
      %v267 = vld [vmem:[%s263 + $0x18] sm:$0xff]
      %s268 = scalar_lea.vmem %s1, 448
      %v269 = vld [vmem:[%s268] sm:$0xff]
      %v270 = vld [vmem:[%s268 + $0x8] sm:$0xff]
      %v271 = vld [vmem:[%s268 + $0x10] sm:$0xff]
      %v272 = vld [vmem:[%s268 + $0x18] sm:$0xff]
      %s273 = scalar_lea.vmem %s1, 480
      %v274 = vld [vmem:[%s273] sm:$0xff]
      %v275 = vld [vmem:[%s273 + $0x8] sm:$0xff]
      %v276 = vld [vmem:[%s273 + $0x10] sm:$0xff]
      %v277 = vld [vmem:[%s273 + $0x18] sm:$0xff]
      %v278 = vld [vmem:[%s192] sm:$0xff]
      %v279 = vld [vmem:[%s192 + $0x8] sm:$0xff]
      %v280 = vld [vmem:[%s192 + $0x10] sm:$0xff]
      %v281 = vld [vmem:[%s192 + $0x18] sm:$0xff]
      %283 = vset.pattern.permute.xlu0 0
      %284 = vperm.xlu0 %283, %v199
      %v285 = vpop.permute.xlu0 %284
      %288 = vset.pattern.permute.xlu0 0
      %289 = vperm.xlu0 %288, %v200
      %v290 = vpop.permute.xlu0 %289
      %293 = vset.pattern.permute.xlu0 0
      %294 = vperm.xlu0 %293, %v201
      %v295 = vpop.permute.xlu0 %294
      %298 = vset.pattern.permute.xlu0 0
      %299 = vperm.xlu0 %298, %v202
      %v300 = vpop.permute.xlu0 %299
      %v302 = vmul.f32 %v285, %v278
      %v303 = vmul.f32 %v290, %v279
      %v304 = vmul.f32 %v295, %v280
      %v305 = vmul.f32 %v300, %v281
      %307 = vset.pattern.permute.xlu0 0
      %308 = vperm.xlu0 %307, %v204
      %v309 = vpop.permute.xlu0 %308
      %312 = vset.pattern.permute.xlu0 0
      %313 = vperm.xlu0 %312, %v205
      %v314 = vpop.permute.xlu0 %313
      %317 = vset.pattern.permute.xlu0 0
      %318 = vperm.xlu0 %317, %v206
      %v319 = vpop.permute.xlu0 %318
      %322 = vset.pattern.permute.xlu0 0
      %323 = vperm.xlu0 %322, %v207
      %v324 = vpop.permute.xlu0 %323
      %v326 = vmul.f32 %v309, %v278
      %v327 = vmul.f32 %v314, %v279
      %v328 = vmul.f32 %v319, %v280
      %v329 = vmul.f32 %v324, %v281
      %334 = vrot.lane.b32.xlu0 %v326, 1
      %v335 = vpop.permute.xlu0 %334
      %336 = vrot.lane.b32.xlu0 %v327, 1
      %v337 = vpop.permute.xlu0 %336
      %338 = vrot.lane.b32.xlu0 %v328, 1
      %v339 = vpop.permute.xlu0 %338
      %340 = vrot.lane.b32.xlu0 %v329, 1
      %v341 = vpop.permute.xlu0 %340
      %v346 = vadd.f32 %v302, %v335
      %v347 = vadd.f32 %v303, %v337
      %v348 = vadd.f32 %v304, %v339
      %v349 = vadd.f32 %v305, %v341
      %351 = vset.pattern.permute.xlu0 0
      %352 = vperm.xlu0 %351, %v209
      %v353 = vpop.permute.xlu0 %352
      %356 = vset.pattern.permute.xlu0 0
      %357 = vperm.xlu0 %356, %v210
      %v358 = vpop.permute.xlu0 %357
      %361 = vset.pattern.permute.xlu0 0
      %362 = vperm.xlu0 %361, %v211
      %v363 = vpop.permute.xlu0 %362
      %366 = vset.pattern.permute.xlu0 0
      %367 = vperm.xlu0 %366, %v212
      %v368 = vpop.permute.xlu0 %367
      %v370 = vmul.f32 %v353, %v278
      %v371 = vmul.f32 %v358, %v279
      %v372 = vmul.f32 %v363, %v280
      %v373 = vmul.f32 %v368, %v281
      %378 = vrot.lane.b32.xlu0 %v370, 2
      %v379 = vpop.permute.xlu0 %378
      %380 = vrot.lane.b32.xlu0 %v371, 2
      %v381 = vpop.permute.xlu0 %380
      %382 = vrot.lane.b32.xlu0 %v372, 2
      %v383 = vpop.permute.xlu0 %382
      %384 = vrot.lane.b32.xlu0 %v373, 2
      %v385 = vpop.permute.xlu0 %384
      %v390 = vadd.f32 %v346, %v379
      %v391 = vadd.f32 %v347, %v381
      %v392 = vadd.f32 %v348, %v383
      %v393 = vadd.f32 %v349, %v385
      %395 = vset.pattern.permute.xlu0 0
      %396 = vperm.xlu0 %395, %v214
      %v397 = vpop.permute.xlu0 %396
      %400 = vset.pattern.permute.xlu0 0
      %401 = vperm.xlu0 %400, %v215
      %v402 = vpop.permute.xlu0 %401
      %405 = vset.pattern.permute.xlu0 0
      %406 = vperm.xlu0 %405, %v216
      %v407 = vpop.permute.xlu0 %406
      %410 = vset.pattern.permute.xlu0 0
      %411 = vperm.xlu0 %410, %v217
      %v412 = vpop.permute.xlu0 %411
      %v414 = vmul.f32 %v397, %v278
      %v415 = vmul.f32 %v402, %v279
      %v416 = vmul.f32 %v407, %v280
      %v417 = vmul.f32 %v412, %v281
      %422 = vrot.lane.b32.xlu0 %v414, 3
      %v423 = vpop.permute.xlu0 %422
      %424 = vrot.lane.b32.xlu0 %v415, 3
      %v425 = vpop.permute.xlu0 %424
      %426 = vrot.lane.b32.xlu0 %v416, 3
      %v427 = vpop.permute.xlu0 %426
      %428 = vrot.lane.b32.xlu0 %v417, 3
      %v429 = vpop.permute.xlu0 %428
      %v434 = vadd.f32 %v390, %v423
      %v435 = vadd.f32 %v391, %v425
      %v436 = vadd.f32 %v392, %v427
      %v437 = vadd.f32 %v393, %v429
      %439 = vset.pattern.permute.xlu0 0
      %440 = vperm.xlu0 %439, %v219
      %v441 = vpop.permute.xlu0 %440
      %444 = vset.pattern.permute.xlu0 0
      %445 = vperm.xlu0 %444, %v220
      %v446 = vpop.permute.xlu0 %445
      %449 = vset.pattern.permute.xlu0 0
      %450 = vperm.xlu0 %449, %v221
      %v451 = vpop.permute.xlu0 %450
      %454 = vset.pattern.permute.xlu0 0
      %455 = vperm.xlu0 %454, %v222
      %v456 = vpop.permute.xlu0 %455
      %v458 = vmul.f32 %v441, %v278
      %v459 = vmul.f32 %v446, %v279
      %v460 = vmul.f32 %v451, %v280
      %v461 = vmul.f32 %v456, %v281
      %466 = vrot.lane.b32.xlu0 %v458, 4
      %v467 = vpop.permute.xlu0 %466
      %468 = vrot.lane.b32.xlu0 %v459, 4
      %v469 = vpop.permute.xlu0 %468
      %470 = vrot.lane.b32.xlu0 %v460, 4
      %v471 = vpop.permute.xlu0 %470
      %472 = vrot.lane.b32.xlu0 %v461, 4
      %v473 = vpop.permute.xlu0 %472
      %v478 = vadd.f32 %v434, %v467
      %v479 = vadd.f32 %v435, %v469
      %v480 = vadd.f32 %v436, %v471
      %v481 = vadd.f32 %v437, %v473
      %483 = vset.pattern.permute.xlu0 0
      %484 = vperm.xlu0 %483, %v224
      %v485 = vpop.permute.xlu0 %484
      %488 = vset.pattern.permute.xlu0 0
      %489 = vperm.xlu0 %488, %v225
      %v490 = vpop.permute.xlu0 %489
      %493 = vset.pattern.permute.xlu0 0
      %494 = vperm.xlu0 %493, %v226
      %v495 = vpop.permute.xlu0 %494
      %498 = vset.pattern.permute.xlu0 0
      %499 = vperm.xlu0 %498, %v227
      %v500 = vpop.permute.xlu0 %499
      %v502 = vmul.f32 %v485, %v278
      %v503 = vmul.f32 %v490, %v279
      %v504 = vmul.f32 %v495, %v280
      %v505 = vmul.f32 %v500, %v281
      %510 = vrot.lane.b32.xlu0 %v502, 5
      %v511 = vpop.permute.xlu0 %510
      %512 = vrot.lane.b32.xlu0 %v503, 5
      %v513 = vpop.permute.xlu0 %512
      %514 = vrot.lane.b32.xlu0 %v504, 5
      %v515 = vpop.permute.xlu0 %514
      %516 = vrot.lane.b32.xlu0 %v505, 5
      %v517 = vpop.permute.xlu0 %516
      %v522 = vadd.f32 %v478, %v511
      %v523 = vadd.f32 %v479, %v513
      %v524 = vadd.f32 %v480, %v515
      %v525 = vadd.f32 %v481, %v517
      %527 = vset.pattern.permute.xlu0 0
      %528 = vperm.xlu0 %527, %v229
      %v529 = vpop.permute.xlu0 %528
      %532 = vset.pattern.permute.xlu0 0
      %533 = vperm.xlu0 %532, %v230
      %v534 = vpop.permute.xlu0 %533
      %537 = vset.pattern.permute.xlu0 0
      %538 = vperm.xlu0 %537, %v231
      %v539 = vpop.permute.xlu0 %538
      %542 = vset.pattern.permute.xlu0 0
      %543 = vperm.xlu0 %542, %v232
      %v544 = vpop.permute.xlu0 %543
      %v546 = vmul.f32 %v529, %v278
      %v547 = vmul.f32 %v534, %v279
      %v548 = vmul.f32 %v539, %v280
      %v549 = vmul.f32 %v544, %v281
      %554 = vrot.lane.b32.xlu0 %v546, 6
      %v555 = vpop.permute.xlu0 %554
      %556 = vrot.lane.b32.xlu0 %v547, 6
      %v557 = vpop.permute.xlu0 %556
      %558 = vrot.lane.b32.xlu0 %v548, 6
      %v559 = vpop.permute.xlu0 %558
      %560 = vrot.lane.b32.xlu0 %v549, 6
      %v561 = vpop.permute.xlu0 %560
      %v566 = vadd.f32 %v522, %v555
      %v567 = vadd.f32 %v523, %v557
      %v568 = vadd.f32 %v524, %v559
      %v569 = vadd.f32 %v525, %v561
      %571 = vset.pattern.permute.xlu0 0
      %572 = vperm.xlu0 %571, %v234
      %v573 = vpop.permute.xlu0 %572
      %576 = vset.pattern.permute.xlu0 0
      %577 = vperm.xlu0 %576, %v235
      %v578 = vpop.permute.xlu0 %577
      %581 = vset.pattern.permute.xlu0 0
      %582 = vperm.xlu0 %581, %v236
      %v583 = vpop.permute.xlu0 %582
      %586 = vset.pattern.permute.xlu0 0
      %587 = vperm.xlu0 %586, %v237
      %v588 = vpop.permute.xlu0 %587
      %v590 = vmul.f32 %v573, %v278
      %v591 = vmul.f32 %v578, %v279
      %v592 = vmul.f32 %v583, %v280
      %v593 = vmul.f32 %v588, %v281
      %598 = vrot.lane.b32.xlu0 %v590, 7
      %v599 = vpop.permute.xlu0 %598
      %600 = vrot.lane.b32.xlu0 %v591, 7
      %v601 = vpop.permute.xlu0 %600
      %602 = vrot.lane.b32.xlu0 %v592, 7
      %v603 = vpop.permute.xlu0 %602
      %604 = vrot.lane.b32.xlu0 %v593, 7
      %v605 = vpop.permute.xlu0 %604
      %v610 = vadd.f32 %v566, %v599
      %v611 = vadd.f32 %v567, %v601
      %v612 = vadd.f32 %v568, %v603
      %v613 = vadd.f32 %v569, %v605
      %615 = vset.pattern.permute.xlu0 0
      %616 = vperm.xlu0 %615, %v239
      %v617 = vpop.permute.xlu0 %616
      %620 = vset.pattern.permute.xlu0 0
      %621 = vperm.xlu0 %620, %v240
      %v622 = vpop.permute.xlu0 %621
      %625 = vset.pattern.permute.xlu0 0
      %626 = vperm.xlu0 %625, %v241
      %v627 = vpop.permute.xlu0 %626
      %630 = vset.pattern.permute.xlu0 0
      %631 = vperm.xlu0 %630, %v242
      %v632 = vpop.permute.xlu0 %631
      %v634 = vmul.f32 %v617, %v278
      %v635 = vmul.f32 %v622, %v279
      %v636 = vmul.f32 %v627, %v280
      %v637 = vmul.f32 %v632, %v281
      %642 = vrot.lane.b32.xlu0 %v634, 8
      %v643 = vpop.permute.xlu0 %642
      %644 = vrot.lane.b32.xlu0 %v635, 8
      %v645 = vpop.permute.xlu0 %644
      %646 = vrot.lane.b32.xlu0 %v636, 8
      %v647 = vpop.permute.xlu0 %646
      %648 = vrot.lane.b32.xlu0 %v637, 8
      %v649 = vpop.permute.xlu0 %648
      %v654 = vadd.f32 %v610, %v643
      %v655 = vadd.f32 %v611, %v645
      %v656 = vadd.f32 %v612, %v647
      %v657 = vadd.f32 %v613, %v649
      %659 = vset.pattern.permute.xlu0 0
      %660 = vperm.xlu0 %659, %v244
      %v661 = vpop.permute.xlu0 %660
      %664 = vset.pattern.permute.xlu0 0
      %665 = vperm.xlu0 %664, %v245
      %v666 = vpop.permute.xlu0 %665
      %669 = vset.pattern.permute.xlu0 0
      %670 = vperm.xlu0 %669, %v246
      %v671 = vpop.permute.xlu0 %670
      %674 = vset.pattern.permute.xlu0 0
      %675 = vperm.xlu0 %674, %v247
      %v676 = vpop.permute.xlu0 %675
      %v678 = vmul.f32 %v661, %v278
      %v679 = vmul.f32 %v666, %v279
      %v680 = vmul.f32 %v671, %v280
      %v681 = vmul.f32 %v676, %v281
      %686 = vrot.lane.b32.xlu0 %v678, 9
      %v687 = vpop.permute.xlu0 %686
      %688 = vrot.lane.b32.xlu0 %v679, 9
      %v689 = vpop.permute.xlu0 %688
      %690 = vrot.lane.b32.xlu0 %v680, 9
      %v691 = vpop.permute.xlu0 %690
      %692 = vrot.lane.b32.xlu0 %v681, 9
      %v693 = vpop.permute.xlu0 %692
      %v698 = vadd.f32 %v654, %v687
      %v699 = vadd.f32 %v655, %v689
      %v700 = vadd.f32 %v656, %v691
      %v701 = vadd.f32 %v657, %v693
      %703 = vset.pattern.permute.xlu0 0
      %704 = vperm.xlu0 %703, %v249
      %v705 = vpop.permute.xlu0 %704
      %708 = vset.pattern.permute.xlu0 0
      %709 = vperm.xlu0 %708, %v250
      %v710 = vpop.permute.xlu0 %709
      %713 = vset.pattern.permute.xlu0 0
      %714 = vperm.xlu0 %713, %v251
      %v715 = vpop.permute.xlu0 %714
      %718 = vset.pattern.permute.xlu0 0
      %719 = vperm.xlu0 %718, %v252
      %v720 = vpop.permute.xlu0 %719
      %v722 = vmul.f32 %v705, %v278
      %v723 = vmul.f32 %v710, %v279
      %v724 = vmul.f32 %v715, %v280
      %v725 = vmul.f32 %v720, %v281
      %730 = vrot.lane.b32.xlu0 %v722, 10
      %v731 = vpop.permute.xlu0 %730
      %732 = vrot.lane.b32.xlu0 %v723, 10
      %v733 = vpop.permute.xlu0 %732
      %734 = vrot.lane.b32.xlu0 %v724, 10
      %v735 = vpop.permute.xlu0 %734
      %736 = vrot.lane.b32.xlu0 %v725, 10
      %v737 = vpop.permute.xlu0 %736
      %v742 = vadd.f32 %v698, %v731
      %v743 = vadd.f32 %v699, %v733
      %v744 = vadd.f32 %v700, %v735
      %v745 = vadd.f32 %v701, %v737
      %747 = vset.pattern.permute.xlu0 0
      %748 = vperm.xlu0 %747, %v254
      %v749 = vpop.permute.xlu0 %748
      %752 = vset.pattern.permute.xlu0 0
      %753 = vperm.xlu0 %752, %v255
      %v754 = vpop.permute.xlu0 %753
      %757 = vset.pattern.permute.xlu0 0
      %758 = vperm.xlu0 %757, %v256
      %v759 = vpop.permute.xlu0 %758
      %762 = vset.pattern.permute.xlu0 0
      %763 = vperm.xlu0 %762, %v257
      %v764 = vpop.permute.xlu0 %763
      %v766 = vmul.f32 %v749, %v278
      %v767 = vmul.f32 %v754, %v279
      %v768 = vmul.f32 %v759, %v280
      %v769 = vmul.f32 %v764, %v281
      %774 = vrot.lane.b32.xlu0 %v766, 11
      %v775 = vpop.permute.xlu0 %774
      %776 = vrot.lane.b32.xlu0 %v767, 11
      %v777 = vpop.permute.xlu0 %776
      %778 = vrot.lane.b32.xlu0 %v768, 11
      %v779 = vpop.permute.xlu0 %778
      %780 = vrot.lane.b32.xlu0 %v769, 11
      %v781 = vpop.permute.xlu0 %780
      %v786 = vadd.f32 %v742, %v775
      %v787 = vadd.f32 %v743, %v777
      %v788 = vadd.f32 %v744, %v779
      %v789 = vadd.f32 %v745, %v781
      %791 = vset.pattern.permute.xlu0 0
      %792 = vperm.xlu0 %791, %v259
      %v793 = vpop.permute.xlu0 %792
      %796 = vset.pattern.permute.xlu0 0
      %797 = vperm.xlu0 %796, %v260
      %v798 = vpop.permute.xlu0 %797
      %801 = vset.pattern.permute.xlu0 0
      %802 = vperm.xlu0 %801, %v261
      %v803 = vpop.permute.xlu0 %802
      %806 = vset.pattern.permute.xlu0 0
      %807 = vperm.xlu0 %806, %v262
      %v808 = vpop.permute.xlu0 %807
      %v810 = vmul.f32 %v793, %v278
      %v811 = vmul.f32 %v798, %v279
      %v812 = vmul.f32 %v803, %v280
      %v813 = vmul.f32 %v808, %v281
      %818 = vrot.lane.b32.xlu0 %v810, 12
      %v819 = vpop.permute.xlu0 %818
      %820 = vrot.lane.b32.xlu0 %v811, 12
      %v821 = vpop.permute.xlu0 %820
      %822 = vrot.lane.b32.xlu0 %v812, 12
      %v823 = vpop.permute.xlu0 %822
      %824 = vrot.lane.b32.xlu0 %v813, 12
      %v825 = vpop.permute.xlu0 %824
      %v830 = vadd.f32 %v786, %v819
      %v831 = vadd.f32 %v787, %v821
      %v832 = vadd.f32 %v788, %v823
      %v833 = vadd.f32 %v789, %v825
      %835 = vset.pattern.permute.xlu0 0
      %836 = vperm.xlu0 %835, %v264
      %v837 = vpop.permute.xlu0 %836
      %840 = vset.pattern.permute.xlu0 0
      %841 = vperm.xlu0 %840, %v265
      %v842 = vpop.permute.xlu0 %841
      %845 = vset.pattern.permute.xlu0 0
      %846 = vperm.xlu0 %845, %v266
      %v847 = vpop.permute.xlu0 %846
      %850 = vset.pattern.permute.xlu0 0
      %851 = vperm.xlu0 %850, %v267
      %v852 = vpop.permute.xlu0 %851
      %v854 = vmul.f32 %v837, %v278
      %v855 = vmul.f32 %v842, %v279
      %v856 = vmul.f32 %v847, %v280
      %v857 = vmul.f32 %v852, %v281
      %862 = vrot.lane.b32.xlu0 %v854, 13
      %v863 = vpop.permute.xlu0 %862
      %864 = vrot.lane.b32.xlu0 %v855, 13
      %v865 = vpop.permute.xlu0 %864
      %866 = vrot.lane.b32.xlu0 %v856, 13
      %v867 = vpop.permute.xlu0 %866
      %868 = vrot.lane.b32.xlu0 %v857, 13
      %v869 = vpop.permute.xlu0 %868
      %v874 = vadd.f32 %v830, %v863
      %v875 = vadd.f32 %v831, %v865
      %v876 = vadd.f32 %v832, %v867
      %v877 = vadd.f32 %v833, %v869
      %879 = vset.pattern.permute.xlu0 0
      %880 = vperm.xlu0 %879, %v269
      %v881 = vpop.permute.xlu0 %880
      %884 = vset.pattern.permute.xlu0 0
      %885 = vperm.xlu0 %884, %v270
      %v886 = vpop.permute.xlu0 %885
      %889 = vset.pattern.permute.xlu0 0
      %890 = vperm.xlu0 %889, %v271
      %v891 = vpop.permute.xlu0 %890
      %894 = vset.pattern.permute.xlu0 0
      %895 = vperm.xlu0 %894, %v272
      %v896 = vpop.permute.xlu0 %895
      %v898 = vmul.f32 %v881, %v278
      %v899 = vmul.f32 %v886, %v279
      %v900 = vmul.f32 %v891, %v280
      %v901 = vmul.f32 %v896, %v281
      %906 = vrot.lane.b32.xlu0 %v898, 14
      %v907 = vpop.permute.xlu0 %906
      %908 = vrot.lane.b32.xlu0 %v899, 14
      %v909 = vpop.permute.xlu0 %908
      %910 = vrot.lane.b32.xlu0 %v900, 14
      %v911 = vpop.permute.xlu0 %910
      %912 = vrot.lane.b32.xlu0 %v901, 14
      %v913 = vpop.permute.xlu0 %912
      %v918 = vadd.f32 %v874, %v907
      %v919 = vadd.f32 %v875, %v909
      %v920 = vadd.f32 %v876, %v911
      %v921 = vadd.f32 %v877, %v913
      %923 = vset.pattern.permute.xlu0 0
      %924 = vperm.xlu0 %923, %v274
      %v925 = vpop.permute.xlu0 %924
      %928 = vset.pattern.permute.xlu0 0
      %929 = vperm.xlu0 %928, %v275
      %v930 = vpop.permute.xlu0 %929
      %933 = vset.pattern.permute.xlu0 0
      %934 = vperm.xlu0 %933, %v276
      %v935 = vpop.permute.xlu0 %934
      %938 = vset.pattern.permute.xlu0 0
      %939 = vperm.xlu0 %938, %v277
      %v940 = vpop.permute.xlu0 %939
      %v942 = vmul.f32 %v925, %v278
      %v943 = vmul.f32 %v930, %v279
      %v944 = vmul.f32 %v935, %v280
      %v945 = vmul.f32 %v940, %v281
      %950 = vrot.lane.b32.xlu0 %v942, 15
      %v951 = vpop.permute.xlu0 %950
      %952 = vrot.lane.b32.xlu0 %v943, 15
      %v953 = vpop.permute.xlu0 %952
      %954 = vrot.lane.b32.xlu0 %v944, 15
      %v955 = vpop.permute.xlu0 %954
      %956 = vrot.lane.b32.xlu0 %v945, 15
      %v957 = vpop.permute.xlu0 %956
      %v962 = vadd.f32 %v918, %v951
      %v963 = vadd.f32 %v919, %v953
      %v964 = vadd.f32 %v920, %v955
      %v965 = vadd.f32 %v921, %v957
      %v966 = vmul.f32 %v962, 0.5
      %v967 = vmul.f32 %v963, 0.5
      %v968 = vmul.f32 %v964, 0.5
      %v969 = vmul.f32 %v965, 0.5
      %v970 = vmul.f32 %v962, 0.70710677
      %v971 = vmul.f32 %v963, 0.70710677
      %v972 = vmul.f32 %v964, 0.70710677
      %v973 = vmul.f32 %v965, 0.70710677
      %v974 = vand.u32 2147483647, %v970
      %v975 = vand.u32 2147483647, %v971
      %v976 = vand.u32 2147483647, %v972
      %v977 = vand.u32 2147483647, %v973
      %v978 = vmul.f32 %v974, 0.3275911
      %v979 = vmul.f32 %v975, 0.3275911
      %v980 = vmul.f32 %v976, 0.3275911
      %v981 = vmul.f32 %v977, 0.3275911
      %v982 = vadd.f32 %v978, 1.0
      %v983 = vadd.f32 %v979, 1.0
      %v984 = vadd.f32 %v980, 1.0
      %v985 = vadd.f32 %v981, 1.0
      %v986 = vrcp.pop %v982
      %v987 = vrcp.pop %v983
      %v988 = vrcp.pop %v984
      %v989 = vrcp.pop %v985
      %v990 = vmul.f32 %v986, 1.0614054
      %v991 = vmul.f32 %v987, 1.0614054
      %v992 = vmul.f32 %v988, 1.0614054
      %v993 = vmul.f32 %v989, 1.0614054
      %v994 = vadd.f32 %v990, -1.4531521
      %v995 = vadd.f32 %v991, -1.4531521
      %v996 = vadd.f32 %v992, -1.4531521
      %v997 = vadd.f32 %v993, -1.4531521
      %v998 = vmul.f32 %v994, %v986
      %v999 = vmul.f32 %v995, %v987
      %v1000 = vmul.f32 %v996, %v988
      %v1001 = vmul.f32 %v997, %v989
      %v1002 = vadd.f32 %v998, 1.4214138
      %v1003 = vadd.f32 %v999, 1.4214138
      %v1004 = vadd.f32 %v1000, 1.4214138
      %v1005 = vadd.f32 %v1001, 1.4214138
      %v1006 = vmul.f32 %v1002, %v986
      %v1007 = vmul.f32 %v1003, %v987
      %v1008 = vmul.f32 %v1004, %v988
      %v1009 = vmul.f32 %v1005, %v989
      %v1010 = vadd.f32 %v1006, -0.28449672
      %v1011 = vadd.f32 %v1007, -0.28449672
      %v1012 = vadd.f32 %v1008, -0.28449672
      %v1013 = vadd.f32 %v1009, -0.28449672
      %v1014 = vmul.f32 %v1010, %v986
      %v1015 = vmul.f32 %v1011, %v987
      %v1016 = vmul.f32 %v1012, %v988
      %v1017 = vmul.f32 %v1013, %v989
      %v1018 = vadd.f32 %v1014, 0.2548296
      %v1019 = vadd.f32 %v1015, 0.2548296
      %v1020 = vadd.f32 %v1016, 0.2548296
      %v1021 = vadd.f32 %v1017, 0.2548296
      %v1022 = vmul.f32 %v1018, %v986
      %v1023 = vmul.f32 %v1019, %v987
      %v1024 = vmul.f32 %v1020, %v988
      %v1025 = vmul.f32 %v1021, %v989
      %v1026 = vsub.f32 0.0, %v974
      %v1027 = vsub.f32 0.0, %v975
      %v1028 = vsub.f32 0.0, %v976
      %v1029 = vsub.f32 0.0, %v977
      %v1030 = vmul.f32 %v1026, %v974
      %v1031 = vmul.f32 %v1027, %v975
      %v1032 = vmul.f32 %v1028, %v976
      %v1033 = vmul.f32 %v1029, %v977
      %v1034 = vmul.f32 %v1030, 1.442695
      %v1035 = vpow.pop %v1034
      %v1036 = vmul.f32 %v1031, 1.442695
      %v1037 = vpow.pop %v1036
      %v1038 = vmul.f32 %v1032, 1.442695
      %v1039 = vpow.pop %v1038
      %v1040 = vmul.f32 %v1033, 1.442695
      %v1041 = vpow.pop %v1040
      %v1042 = vmul.f32 %v1022, %v1035
      %v1043 = vmul.f32 %v1023, %v1037
      %v1044 = vmul.f32 %v1024, %v1039
      %v1045 = vmul.f32 %v1025, %v1041
      %v1046 = vsub.f32 1.0, %v1042
      %v1047 = vsub.f32 1.0, %v1043
      %v1048 = vsub.f32 1.0, %v1044
      %v1049 = vsub.f32 1.0, %v1045
      %vm1050 = vcmp.lt.f32.partialorder %v970, 0.0
      %vm1051 = vcmp.lt.f32.partialorder %v971, 0.0
      %vm1052 = vcmp.lt.f32.partialorder %v972, 0.0
      %vm1053 = vcmp.lt.f32.partialorder %v973, 0.0
      %v1054 = vsub.f32 0.0, %v1046
      %v1055 = vsub.f32 0.0, %v1047
      %v1056 = vsub.f32 0.0, %v1048
      %v1057 = vsub.f32 0.0, %v1049
      %v1058 = vsel %vm1050, %v1054, %v1046
      %v1059 = vsel %vm1051, %v1055, %v1047
      %v1060 = vsel %vm1052, %v1056, %v1048
      %v1061 = vsel %vm1053, %v1057, %v1049
      %v1062 = vadd.f32 %v1058, 1.0
      %v1063 = vadd.f32 %v1059, 1.0
      %v1064 = vadd.f32 %v1060, 1.0
      %v1065 = vadd.f32 %v1061, 1.0
      %v1066 = vmul.f32 %v966, %v1062
      %v1067 = vmul.f32 %v967, %v1063
      %v1068 = vmul.f32 %v968, %v1064
      %v1069 = vmul.f32 %v969, %v1065
      %v1070 = vpack.c.bf16 %v1066, %v1066
      %v1071 = vpack.c.bf16 %v1067, %v1067
      %v1072 = vpack.c.bf16 %v1068, %v1068
      %v1073 = vpack.c.bf16 %v1069, %v1069
      %1078 = vrot.lane.b32.xlu0 %v1070, 113
      %v1079 = vpop.permute.xlu0 %1078
      %1080 = vrot.lane.b32.xlu0 %v1071, 113
      %v1081 = vpop.permute.xlu0 %1080
      %1082 = vrot.lane.b32.xlu0 %v1072, 113
      %v1083 = vpop.permute.xlu0 %1082
      %1084 = vrot.lane.b32.xlu0 %v1073, 113
      %v1085 = vpop.permute.xlu0 %1084
      %vm1090 = vcmask 125952
      %1091 = vst.msk [vmem:[#allocation2] sm:$0xf] %vm1090, %v1079
      %1092 = vst.msk [vmem:[#allocation2 + $0x4] sm:$0xf] %vm1090, %v1081
      %1093 = vst.msk [vmem:[#allocation2 + $0x8] sm:$0xf] %vm1090, %v1083
      %1094 = vst.msk [vmem:[#allocation2 + $0xc] sm:$0xf] %vm1090, %v1085
      %v1095 = vld [vmem:[#allocation2] sm:$0xf]
      %v1096 = vld [vmem:[#allocation2 + $0x4] sm:$0xf]
      %v1097 = vld [vmem:[#allocation2 + $0x8] sm:$0xf]
      %v1098 = vld [vmem:[#allocation2 + $0xc] sm:$0xf]
      %v1099 = vld [vmem:[%s2] sm:$0xf]
      %v1100 = vld [vmem:[%s2 + $0x4] sm:$0xf]
      %v1101 = vld [vmem:[%s2 + $0x8] sm:$0xf]
      %v1102 = vld [vmem:[%s2 + $0xc] sm:$0xf]
      %v1103 = vld [vmem:[%s2 + $0x10] sm:$0xf]
      %v1104 = vld [vmem:[%s2 + $0x14] sm:$0xf]
      %v1105 = vld [vmem:[%s2 + $0x18] sm:$0xf]
      %v1106 = vld [vmem:[%s2 + $0x1c] sm:$0xf]
      %v1107 = vld [vmem:[%s3] sm:$0xff]
      %v1108 = vld [vmem:[%s3 + $0x8] sm:$0xff]
      %v1109 = vld [vmem:[%s3 + $0x10] sm:$0xff]
      %v1110 = vld [vmem:[%s3 + $0x18] sm:$0xff]
      %v1111 = vld [vmem:[%s3 + $0x20] sm:$0xff]
      %v1112 = vld [vmem:[%s3 + $0x28] sm:$0xff]
      %v1113 = vld [vmem:[%s3 + $0x30] sm:$0xff]
      %v1114 = vld [vmem:[%s3 + $0x38] sm:$0xff]
      %1116 = vset.pattern.permute.xlu0 0
      %1117 = vperm.xlu0 %1116, %v1107
      %v1118 = vpop.permute.xlu0 %1117
      %1121 = vset.pattern.permute.xlu0 0
      %1122 = vperm.xlu0 %1121, %v1108
      %v1123 = vpop.permute.xlu0 %1122
      %1126 = vset.pattern.permute.xlu0 0
      %1127 = vperm.xlu0 %1126, %v1109
      %v1128 = vpop.permute.xlu0 %1127
      %1131 = vset.pattern.permute.xlu0 0
      %1132 = vperm.xlu0 %1131, %v1110
      %v1133 = vpop.permute.xlu0 %1132
      %1136 = vset.pattern.permute.xlu0 0
      %1137 = vperm.xlu0 %1136, %v1111
      %v1138 = vpop.permute.xlu0 %1137
      %1141 = vset.pattern.permute.xlu0 0
      %1142 = vperm.xlu0 %1141, %v1112
      %v1143 = vpop.permute.xlu0 %1142
      %1146 = vset.pattern.permute.xlu0 0
      %1147 = vperm.xlu0 %1146, %v1113
      %v1148 = vpop.permute.xlu0 %1147
      %1151 = vset.pattern.permute.xlu0 0
      %1152 = vperm.xlu0 %1151, %v1114
      %v1153 = vpop.permute.xlu0 %1152
      %v1163 = vunpack.c.l.b16 %v1099
      %v1164 = vunpack.c.l.b16 %v1100
      %v1165 = vunpack.c.l.b16 %v1101
      %v1166 = vunpack.c.l.b16 %v1102
      %v1167 = vunpack.c.l.b16 %v1103
      %v1168 = vunpack.c.l.b16 %v1104
      %v1169 = vunpack.c.l.b16 %v1105
      %v1170 = vunpack.c.l.b16 %v1106
      %v1171 = vpack.c.b16 %v1164, %v1163
      %v1172 = vpack.c.b16 %v1166, %v1165
      %v1173 = vpack.c.b16 %v1168, %v1167
      %v1174 = vpack.c.b16 %v1170, %v1169
      %v1179 = vunpack.c.l.b16 %v1095
      %v1180 = vunpack.c.l.b16 %v1096
      %v1181 = vunpack.c.l.b16 %v1097
      %v1182 = vunpack.c.l.b16 %v1098
      %v1183 = vpack.c.b16 %v1180, %v1179
      %v1184 = vpack.c.b16 %v1182, %v1181
      %vm1187 = vcmask 261120
      %v1189 = vsel %vm1187, %v1171, 0
      %v1192 = vsel %vm1187, %v1172, 0
      %v1195 = vsel %vm1187, %v1173, 0
      %v1198 = vsel %vm1187, %v1174, 0
      %1200 = vmatpush.bf16.msra.mxu0 0
      %1201 = vmatpush.bf16.msra.mxu0 0
      %1202 = vmatpush.bf16.msra.mxu0 0
      %1203 = vmatpush.bf16.msra.mxu0 0
      %1204 = vmatpush.bf16.msra.mxu0 0
      %1205 = vmatpush.bf16.msra.mxu0 0
      %1206 = vmatpush.bf16.msra.mxu0 %v1184
      %1207 = vmatpush.bf16.msra.mxu0 %v1183
      %1208 = vmatmul.bf16.gmra.mxu0 %v1189
      %v1209 = vpop.f32.mrf.mxu0
      %v1210 = vadd.f32 %v1118, %v1209
      %v1211 = vpop.f32.mrf.mxu0
      %v1212 = vadd.f32 %v1123, %v1211
      %1213 = vmatmul.bf16.gmra.mxu0 %v1192
      %v1214 = vpop.f32.mrf.mxu0
      %v1215 = vadd.f32 %v1128, %v1214
      %v1216 = vpop.f32.mrf.mxu0
      %v1217 = vadd.f32 %v1133, %v1216
      %1218 = vmatmul.bf16.gmra.mxu0 %v1195
      %v1219 = vpop.f32.mrf.mxu0
      %v1220 = vadd.f32 %v1138, %v1219
      %v1221 = vpop.f32.mrf.mxu0
      %v1222 = vadd.f32 %v1143, %v1221
      %1223 = vmatmul.bf16.gmra.mxu0 %v1198
      %v1224 = vpop.f32.mrf.mxu0
      %v1225 = vadd.f32 %v1148, %v1224
      %v1226 = vpop.f32.mrf.mxu0
      %v1227 = vadd.f32 %v1153, %v1226
      %1228 = vdwg.mxu0
      %v1229 = vxor.u32 %v1220, 2147483648
      %v1230 = vxor.u32 %v1222, 2147483648
      %v1231 = vxor.u32 %v1225, 2147483648
      %v1232 = vxor.u32 %v1227, 2147483648
      %v1233 = vmul.f32 %v1229, 1.442695
      %v1234 = vpow.pop %v1233
      %v1235 = vmul.f32 %v1230, 1.442695
      %v1236 = vpow.pop %v1235
      %v1237 = vmul.f32 %v1231, 1.442695
      %v1238 = vpow.pop %v1237
      %v1239 = vmul.f32 %v1232, 1.442695
      %v1240 = vpow.pop %v1239
      %v1241 = vadd.f32 %v1234, 1.0
      %v1242 = vadd.f32 %v1236, 1.0
      %v1243 = vadd.f32 %v1238, 1.0
      %v1244 = vadd.f32 %v1240, 1.0
      %v1245 = vrcp.pop %v1241
      %v1246 = vmul.f32 %v1241, %v1245
      %v1247 = vsub.f32 1.0, %v1246
      %v1248 = vmul.f32 %v1245, %v1247
      %v1249 = vadd.f32 %v1245, %v1248
      %vm1250 = vweird.f32 %v1241
      %vm1251 = vweird.f32 %v1245
      %vm1252 = vmor %vm1250, %vm1251
      %v1253 = vsel %vm1252, %v1245, %v1249
      %v1254 = vand.u32 2147483647, %v1241
      %vm1255 = vcmp.eq.f32.partialorder %v1254, 8.507059e+37
      %v1256 = vand.u32 %v1241, 2147483648
      %v1257 = vor.u32 1.1754944e-38, %v1256
      %v1258 = vsel %vm1255, %v1257, %v1253
      %v1259 = vmul.f32 1.0, %v1258
      %v1260 = vrcp.pop %v1242
      %v1261 = vmul.f32 %v1242, %v1260
      %v1262 = vsub.f32 1.0, %v1261
      %v1263 = vmul.f32 %v1260, %v1262
      %v1264 = vadd.f32 %v1260, %v1263
      %vm1265 = vweird.f32 %v1242
      %vm1266 = vweird.f32 %v1260
      %vm1267 = vmor %vm1265, %vm1266
      %v1268 = vsel %vm1267, %v1260, %v1264
      %v1269 = vand.u32 2147483647, %v1242
      %vm1270 = vcmp.eq.f32.partialorder %v1269, 8.507059e+37
      %v1271 = vand.u32 %v1242, 2147483648
      %v1272 = vor.u32 1.1754944e-38, %v1271
      %v1273 = vsel %vm1270, %v1272, %v1268
      %v1274 = vmul.f32 1.0, %v1273
      %v1275 = vrcp.pop %v1243
      %v1276 = vmul.f32 %v1243, %v1275
      %v1277 = vsub.f32 1.0, %v1276
      %v1278 = vmul.f32 %v1275, %v1277
      %v1279 = vadd.f32 %v1275, %v1278
      %vm1280 = vweird.f32 %v1243
      %vm1281 = vweird.f32 %v1275
      %vm1282 = vmor %vm1280, %vm1281
      %v1283 = vsel %vm1282, %v1275, %v1279
      %v1284 = vand.u32 2147483647, %v1243
      %vm1285 = vcmp.eq.f32.partialorder %v1284, 8.507059e+37
      %v1286 = vand.u32 %v1243, 2147483648
      %v1287 = vor.u32 1.1754944e-38, %v1286
      %v1288 = vsel %vm1285, %v1287, %v1283
      %v1289 = vmul.f32 1.0, %v1288
      %v1290 = vrcp.pop %v1244
      %v1291 = vmul.f32 %v1244, %v1290
      %v1292 = vsub.f32 1.0, %v1291
      %v1293 = vmul.f32 %v1290, %v1292
      %v1294 = vadd.f32 %v1290, %v1293
      %vm1295 = vweird.f32 %v1244
      %vm1296 = vweird.f32 %v1290
      %vm1297 = vmor %vm1295, %vm1296
      %v1298 = vsel %vm1297, %v1290, %v1294
      %v1299 = vand.u32 2147483647, %v1244
      %vm1300 = vcmp.eq.f32.partialorder %v1299, 8.507059e+37
      %v1301 = vand.u32 %v1244, 2147483648
      %v1302 = vor.u32 1.1754944e-38, %v1301
      %v1303 = vsel %vm1300, %v1302, %v1298
      %v1304 = vmul.f32 1.0, %v1303
      %v1305 = vmul.f32 %v1210, %v1259
      %v1306 = vmul.f32 %v1212, %v1274
      %v1307 = vmul.f32 %v1215, %v1289
      %v1308 = vmul.f32 %v1217, %v1304
      %vm1309 = vcmask 130048
      %1310 = vst.msk [vmem:[%s197] sm:$0xff] %vm1309, %v1305
      %1311 = vst.msk [vmem:[%s197 + $0x8] sm:$0xff] %vm1309, %v1306
      %1312 = vst.msk [vmem:[%s197 + $0x10] sm:$0xff] %vm1309, %v1307
      %1313 = vst.msk [vmem:[%s197 + $0x18] sm:$0xff] %vm1309, %v1308
      %p1314 = scmp.lt.s32.totalorder %s15, 1
      %s1315 = scalar_select %p1314, %s15, 1
      %s1316 = smul.addr %s1315, 4
      %s1317 = smul.addr %s1316, 8
      %s1318 = scalar_lea.vmem %s4, %s1317
      // Predicated region
      $region37: #{long_conv_forward.1} parent=35 // pred_check
        %p1319 = pneg %p122
      $region38: #{long_conv_forward.1} parent=35 // pred_check_branch
        %1321 = sbr.rel (%p1319) target = $region40
      $region39: #{long_conv_forward.1} parent=35 // pred_region
        _
      $region40: #{long_conv_forward.1} parent=35 // pred_fallthru
        _
    $region36: #{long_conv_forward.1} parent=5 // pred_fallthru
      _
    %p1322 = scmp.le.s32.totalorder 2, %s10
    // Predicated region
    $region41: #{long_conv_forward.1} parent=5 // pred_check
      %p1323 = pneg %p1322
    $region42: #{long_conv_forward.1} parent=5 // pred_check_branch
      %1325 = sbr.rel (%p1323) target = $region44
    $region43: #{long_conv_forward.1} parent=5 // pred_region
      %s1326 = ssub.s32 %s10, 2
      // Predicated region
      $region45: #{long_conv_forward.1} parent=43 // pred_check
        %p1327 = pneg %p128
      $region46: #{long_conv_forward.1} parent=43 // pred_check_branch
        %1329 = sbr.rel (%p1327) target = $region48
      $region47: #{long_conv_forward.1} parent=43 // pred_region
        %p1330 = scmp.lt.s32.totalorder %s16, 1
        %s1331 = scalar_select %p1330, %s16, 1
        %s1332 = smul.addr %s1331, 4
        %s1333 = smul.addr %s1332, 8
        %s1334 = scalar_lea.vmem %s4, %s1333
      $region48: #{long_conv_forward.1} parent=43 // pred_fallthru
        _
    $region44: #{long_conv_forward.1} parent=5 // pred_fallthru
      _
  $region6: #{long_conv_forward.1} parent=0 // loop_footer
    %s14 = sadd.s32 1, %s10
  $region7: #{long_conv_forward.1} parent=0 // loop_footer_branch
    %9 = sbr.rel target = $region3
  $region8: #{long_conv_forward.1} parent=0 // loop_exit
    _

</llo_original>
